<compile_context>
chip_gen: v7x
topology: tpu7x:2x2x1
jax: 0.10.0
libtpu: 0.0.40
codegen_flags: <defaults>
</compile_context>

<pallas_src>
import numpy as np
import jax
import jax.numpy as jnp
from jax.experimental import pallas as pl
from jax.experimental.pallas import tpu as pltpu

CHANNELS = 8
SCALE = 32
EPS = 1e-5


# ----------------------------------------------------------------------------
# Bilinear-upsample interpolation matrices (nn.Upsample, align_corners=False)
# ----------------------------------------------------------------------------
def _upsample_matrix_1d(out_size: int, in_size: int, scale: int) -> np.ndarray:
    i = np.arange(out_size, dtype=np.float64)
    src = (i + 0.5) / scale - 0.5
    src = np.clip(src, 0.0, None)
    i0 = np.minimum(np.floor(src).astype(np.int64), in_size - 1)
    i1 = np.minimum(i0 + 1, in_size - 1)
    w1 = src - i0
    w0 = 1.0 - w1
    U = np.zeros((out_size, in_size), dtype=np.float64)
    U[np.arange(out_size), i0] += w0
    U[np.arange(out_size), i1] += w1
    return U.astype(np.float32)


# ----------------------------------------------------------------------------
# Device / tiling / VMEM helpers
# ----------------------------------------------------------------------------
def _device_vmem_params():
    """(vmem_limit_cap_bytes, h_tile_budget_bytes), generation-aware.

    v5e/v6e have 128 MiB VMEM per core -> bigger budgets; anything else (v7x has
    only 64 MiB per TensorCore, unknown devices) gets conservative values.
    """
    try:
        kind = jax.devices()[0].device_kind.lower()
    except Exception:
        kind = ""
    if ("v5" in kind) or ("v6" in kind):
        return 96 << 20, 16 << 20
    return 48 << 20, 8 << 20


def _pick_row_tile(M: int, target: int = 2048) -> int:
    """Row tile for the head matmul (M = B*h*w)."""
    if M <= target:
        return M                                   # single block (<= ~4 MiB in bf16)
    for t in range(target, 127, -128):             # prefer lane-dense divisors
        if M % t == 0:
            return t
    for t in range(target - target % 8, 7, -8):
        if M % t == 0:
            return t
    return target                                  # cdiv grid handles the ragged tail


def _pick_h_tile(H: int, W: int, budget_bytes: int) -> int:
    """Largest H-tile (multiple of 8, dividing H) whose blocks fit the budget,
    preferring >=2 tiles so the spatial grid axis can shard across TensorCores."""
    divs = sorted({H // n for n in range(1, H + 1) if H % n == 0}, reverse=True)
    cands = [t for t in divs if (t % 8 == 0) or (t == H)]
    per_row_bytes = W * 4 * (CHANNELS + 3 + CHANNELS)   # out rows + x rows + temps
    for t in cands:
        if t < H and t * per_row_bytes <= budget_bytes:
            return t
    for t in cands:
        if t * per_row_bytes <= budget_bytes:
            return t
    return cands[-1]


def _pad_block_bytes(shape, dtype) -> int:
    dims = list(shape)
    if len(dims) >= 2:
        dims[-2] = -(-dims[-2] // 8) * 8
        dims[-1] = -(-dims[-1] // 128) * 128
    elif len(dims) == 1:
        dims[-1] = -(-dims[-1] // 128) * 128
    n = 1
    for d in dims:
        n *= int(d)
    return n * np.dtype(dtype).itemsize


def _vmem_limit(blocks, cap_bytes) -> int:
    total = sum(_pad_block_bytes(s, d) for s, d in blocks)
    # 2x double-buffered pipeline + headroom for in-kernel temporaries.
    return int(min(max(2 * total + (8 << 20), 24 << 20), cap_bytes))


# ----------------------------------------------------------------------------
# Kernel 1: feature head (BN -> ReLU -> 1x1 conv -> ReLU -> 1x1 conv)
# ----------------------------------------------------------------------------
def head_kernel(feat_ref, a1_ref, b1_ref, w1_ref, b2_ref, w2_ref, z_ref):
    # feat_ref: (TM, 1024) bf16 flattened (batch*spatial, channels-last) features
    f = feat_ref[...].astype(jnp.float32)
    f = jnp.maximum(f * a1_ref[...] + b1_ref[...], 0.0)           # BN(1024)+ReLU (f32 VPU)
    y = jnp.dot(f.astype(jnp.bfloat16), w1_ref[...],              # 1024 -> 64
                preferred_element_type=jnp.float32)               # bf16 MXU, f32 acc
    y = jnp.maximum(y + b2_ref[...], 0.0)                         # folded BN(64) + ReLU
    # 64 -> 8, emitted channel-major: z[c, m] = sum_k w2[k, c] * y[m, k]
    z_ref[...] = jax.lax.dot_general(
        w2_ref[...], y, (((0,), (1,)), ((), ())),
        preferred_element_type=jnp.float32)                       # (8, TM) lane-dense


def conv_head(feat2d, a1, b1, w1p, b2, w2, vmem_cap):
    M, K = feat2d.shape
    tm = _pick_row_tile(M)
    vmem = _vmem_limit([
        ((tm, K), feat2d.dtype), (a1.shape, a1.dtype), (b1.shape, b1.dtype),
        (w1p.shape, w1p.dtype), (b2.shape, b2.dtype), (w2.shape, w2.dtype),
        ((CHANNELS, tm), jnp.float32),
    ], vmem_cap)
    return pl.pallas_call(
        head_kernel,
        out_shape=jax.ShapeDtypeStruct((CHANNELS, M), jnp.float32),
        grid_spec=pltpu.PrefetchScalarGridSpec(
            num_scalar_prefetch=0,
            grid=(pl.cdiv(M, tm),),
            in_specs=[
                pl.BlockSpec((tm, K), lambda i: (i, 0)),
                pl.BlockSpec(a1.shape, lambda i: (0, 0)),
                pl.BlockSpec(b1.shape, lambda i: (0, 0)),
                pl.BlockSpec(w1p.shape, lambda i: (0, 0)),
                pl.BlockSpec(b2.shape, lambda i: (0, 0)),
                pl.BlockSpec(w2.shape, lambda i: (0, 0)),
            ],
            out_specs=pl.BlockSpec((CHANNELS, tm), lambda i: (0, i)),
        ),
        compiler_params=pltpu.CompilerParams(
            dimension_semantics=("parallel",),
            vmem_limit_bytes=vmem),
    )(feat2d, a1, b1, w1p, b2, w2)


# ----------------------------------------------------------------------------
# Kernel 2: separable x32 bilinear upsample + lateral 1x1 conv + mask multiply
# ----------------------------------------------------------------------------
def upsample_kernel(zc_ref, x_ref, uh_ref, uwT_ref, wlat_ref, blat_ref, out_ref):
    # zc_ref : (1, 8*h, w)    coarse channel-major feature maps for this batch
    # x_ref  : (1, 3, TH, W)  NCHW input rows for this (batch, H-tile)
    # uh_ref : (TH, h)        rows of the height interpolation matrix
    # uwT_ref: (w, W)         width interpolation matrix, transposed
    # wlat_ref (3, 8), blat_ref (1, 8): lateral 1x1 conv params (SMEM scalars)
    # out_ref: (1, 8, TH, W)  NCHW output rows
    ch_h = zc_ref.shape[1]
    h = ch_h // CHANNELS

    uwT = uwT_ref[...]                                   # (w, W)
    uh = uh_ref[...]                                     # (TH, h)

    # Width pass: one flat matmul over all 8 channels.
    zc = zc_ref[0]                                       # (8*h, w)
    t = jnp.dot(zc, uwT, preferred_element_type=jnp.float32)   # (8*h, W)

    x3 = x_ref[0]                                        # (3, TH, W)
    x0 = x3[0]
    x1 = x3[1]
    x2 = x3[2]

    # Height pass + lateral conv + mask, one channel at a time (static unroll of 8),
    # storing each channel directly -> small live range, no stacked (8,TH,W) temp.
    for ch in range(CHANNELS):
        t_c = t[ch * h:(ch + 1) * h, :]                  # (h, W) static slice
        up_c = jnp.dot(uh, t_c, preferred_element_type=jnp.float32)   # (TH, W)
        lat = (x0 * wlat_ref[0, ch] + x1 * wlat_ref[1, ch]
               + x2 * wlat_ref[2, ch] + blat_ref[0, ch])
        out_ref[0, ch] = (up_c + lat) * x0


def upsample_lateral_mask(zc, x, Uh, UwT, wlat, blat, vmem_cap, h_budget):
    B, CH, w = zc.shape                    # CH = CHANNELS * h
    _, _, H, W = x.shape
    h = CH // CHANNELS
    th = _pick_h_tile(H, W, h_budget)
    n_h = H // th
    vmem = _vmem_limit([
        ((1, CH, w), zc.dtype),
        ((1, 3, th, W), x.dtype),
        ((th, h), Uh.dtype),
        ((w, W), UwT.dtype),
        ((1, CHANNELS, th, W), jnp.float32),
        ((1, 4, th, W), jnp.float32),      # in-kernel temporaries (t, up_c, lat, ...)
    ], vmem_cap)
    return pl.pallas_call(
        upsample_kernel,
        out_shape=jax.ShapeDtypeStruct((B, CHANNELS, H, W), jnp.float32),
        grid_spec=pltpu.PrefetchScalarGridSpec(
            num_scalar_prefetch=0,
            grid=(B, n_h),
            in_specs=[
                pl.BlockSpec((1, CH, w), lambda b, i: (b, 0, 0)),
                pl.BlockSpec((1, 3, th, W), lambda b, i: (b, 0, i, 0)),
                pl.BlockSpec((th, h), lambda b, i: (i, 0)),
                pl.BlockSpec((w, W), lambda b, i: (0, 0)),
                pl.BlockSpec(memory_space=pltpu.MemorySpace.SMEM),
                pl.BlockSpec(memory_space=pltpu.MemorySpace.SMEM),
            ],
            out_specs=pl.BlockSpec((1, CHANNELS, th, W), lambda b, i: (b, 0, i, 0)),
        ),
        compiler_params=pltpu.CompilerParams(
            dimension_semantics=("parallel", "parallel"),
            vmem_limit_bytes=vmem),
    )(zc, x, Uh, UwT, wlat, blat)


# ----------------------------------------------------------------------------
# Plain-JAX glue
# ----------------------------------------------------------------------------
def surrogate_densenet_features(x_nchw, proj):
    # TODO(synk): pretrained torchvision densenet121 backbone has no clean Pallas
    # equivalent; use a deterministic stand-in (32x32 avg-pool + fixed 3->1024
    # projection) that reproduces the (B, 1024, H/32, W/32) feature-map contract.
    B, C, H, W = x_nchw.shape
    h, w = H // SCALE, W // SCALE
    pooled = x_nchw.reshape(B, C, h, SCALE, w, SCALE).mean(axis=(3, 5))   # (B,3,h,w)
    pooled = pooled.transpose(0, 2, 3, 1)                                  # (B,h,w,3)
    feat = jnp.einsum("bhwc,cd->bhwd", pooled, proj)                       # (B,h,w,1024)
    return feat.reshape(B, h * w, 1024)


def fold_bn(gamma, beta, mean, var):
    a = gamma / jnp.sqrt(var + EPS)
    return a[None, :], (beta - a * mean)[None, :]


def make_net_forward():
    vmem_cap, h_budget = _device_vmem_params()

    def _net_forward(feat_bf16, x, a1, b1, w1p, b2, w2, Uh, Uw, wlat, blat):
        B, hw, Cin = feat_bf16.shape
        _, _, H, W = x.shape
        h, w = H // SCALE, W // SCALE
        # Head: channel-major (8, B*h*w) output, lane-dense stores.
        z = conv_head(feat_bf16.reshape(B * hw, Cin), a1, b1, w1p, b2, w2, vmem_cap)
        # Tiny XLA glue: (8, B, h, w) -> (B, 8*h, w) channel-major coarse maps.
        zc = z.reshape(CHANNELS, B, h, w).transpose(1, 0, 2, 3).reshape(B, CHANNELS * h, w)
        return upsample_lateral_mask(zc, x, Uh, Uw.T, wlat, blat, vmem_cap, h_budget)

    return jax.jit(_net_forward)


def reference(feat_bf16, x, a1, b1, w1p, b2, w2, Uh, Uw, wlat, blat):
    B, hw, _ = feat_bf16.shape
    _, _, H, W = x.shape
    h, w = H // SCALE, W // SCALE
    f = jnp.maximum(feat_bf16.astype(jnp.float32) * a1 + b1, 0.0)
    y = jnp.einsum("bkc,cd->bkd", f.astype(jnp.bfloat16), w1p,
                   preferred_element_type=jnp.float32)
    y = jnp.maximum(y + b2, 0.0)
    z = jnp.einsum("bkd,de->bke", y, w2)                               # (B, hw, 8)
    zc = z.reshape(B, h, w, CHANNELS)
    t = jnp.einsum("Ww,bhwc->bhWc", Uw, zc)
    up = jnp.einsum("Hh,bhWc->bHWc", Uh, t).transpose(0, 3, 1, 2)      # (B, 8, H, W)
    lat = jnp.einsum("bkHW,kc->bcHW", x, wlat) + blat.reshape(1, CHANNELS, 1, 1)
    return (up + lat) * x[:, 0:1]


if __name__ == "__main__":
    # Small shapes: batch=2, 3 input channels, spatial 64 (divisible by 32)
    B, H, W = 2, 64, 64
    h, w = H // SCALE, W // SCALE

    key = jax.random.PRNGKey(0)
    keys = jax.random.split(key, 16)

    x = jax.random.normal(keys[0], (B, 3, H, W), dtype=jnp.float32)   # NCHW input

    proj = 0.05 * jax.random.normal(keys[1], (3, 1024), dtype=jnp.float32)

    g1 = 1.0 + 0.1 * jax.random.normal(keys[2], (1024,), dtype=jnp.float32)
    beta1 = 0.1 * jax.random.normal(keys[3], (1024,), dtype=jnp.float32)
    mean1 = 0.1 * jax.random.normal(keys[4], (1024,), dtype=jnp.float32)
    var1 = jax.random.uniform(keys[5], (1024,), minval=0.5, maxval=1.5)

    w1 = 0.05 * jax.random.normal(keys[6], (1024, 64), dtype=jnp.float32)   # Conv2d(1024,64,1)

    g2 = 1.0 + 0.1 * jax.random.normal(keys[7], (64,), dtype=jnp.float32)
    beta2 = 0.1 * jax.random.normal(keys[8], (64,), dtype=jnp.float32)
    mean2 = 0.1 * jax.random.normal(keys[9], (64,), dtype=jnp.float32)
    var2 = jax.random.uniform(keys[10], (64,), minval=0.5, maxval=1.5)

    w2 = 0.1 * jax.random.normal(keys[11], (64, CHANNELS), dtype=jnp.float32)  # Conv2d(64,8,1)

    wlat = 0.3 * jax.random.normal(keys[12], (3, CHANNELS), dtype=jnp.float32)  # Conv2d(3,8,1)
    blat = 0.1 * jax.random.normal(keys[13], (1, CHANNELS), dtype=jnp.float32)

    a1, b1 = fold_bn(g1, beta1, mean1, var1)         # eval-mode BN folded to affine
    a2, b2 = fold_bn(g2, beta2, mean2, var2)
    w1p = (w1 * a2).astype(jnp.bfloat16)             # fold BN(64) scale into the weight

    Uh = jnp.asarray(_upsample_matrix_1d(H, h, SCALE))        # (H, h)
    Uw = jnp.asarray(_upsample_matrix_1d(W, w, SCALE))        # (W, w)

    # Backbone features, streamed to the head kernel in bf16 (dominant HBM operand).
    feat = surrogate_densenet_features(x, proj).astype(jnp.bfloat16)   # (B, h*w, 1024)

    net_forward = make_net_forward()
    out = net_forward(feat, x, a1, b1, w1p, b2, w2, Uh, Uw, wlat, blat)
    out = jax.block_until_ready(out)

    ref = reference(feat, x, a1, b1, w1p, b2, w2, Uh, Uw, wlat, blat)
    np.testing.assert_allclose(np.asarray(out), np.asarray(ref), rtol=2e-3, atol=2e-3)
    assert out.shape == (B, CHANNELS, H, W)

    print("KERNEL_OK")
</pallas_src>

<mosaic_0001>
module attributes {stable_mosaic.version = 11 : i64} {
  func.func @head_kernel(%arg0: i32, %arg1: memref<8x1024xbf16, #tpu.memory_space<vmem>>, %arg2: memref<1x1024xf32, #tpu.memory_space<vmem>>, %arg3: memref<1x1024xf32, #tpu.memory_space<vmem>>, %arg4: memref<1024x64xbf16, #tpu.memory_space<vmem>>, %arg5: memref<1x64xf32, #tpu.memory_space<vmem>>, %arg6: memref<64x8xf32, #tpu.memory_space<vmem>>, %arg7: memref<8x8xf32, #tpu.memory_space<vmem>>) attributes {dimension_semantics = [#tpu.dimension_semantics<parallel>], iteration_bounds = array<i64: 1>, scalar_prefetch = 0 : i64, scratch_operands = 0 : i64, tpu.core_type = #tpu.core_type<tc>, window_params = [{transform_indices = @transform_0, window_bounds = array<i64: 8, 1024>}, {pipeline_mode = #tpu.pipeline_mode<synchronous>, transform_indices = @transform_1, window_bounds = array<i64: 1, 1024>}, {pipeline_mode = #tpu.pipeline_mode<synchronous>, transform_indices = @transform_2, window_bounds = array<i64: 1, 1024>}, {pipeline_mode = #tpu.pipeline_mode<synchronous>, transform_indices = @transform_3, window_bounds = array<i64: 1024, 64>}, {pipeline_mode = #tpu.pipeline_mode<synchronous>, transform_indices = @transform_4, window_bounds = array<i64: 1, 64>}, {pipeline_mode = #tpu.pipeline_mode<synchronous>, transform_indices = @transform_5, window_bounds = array<i64: 64, 8>}, {transform_indices = @transform_6, window_bounds = array<i64: 8, 8>}]} {
    %c0 = arith.constant 0 : index
    %c0_0 = arith.constant 0 : index
    %0 = vector.load %arg1[%c0, %c0_0] : memref<8x1024xbf16, #tpu.memory_space<vmem>>, vector<8x1024xbf16>
    %1 = arith.extf %0 : vector<8x1024xbf16> to vector<8x1024xf32>
    %c0_1 = arith.constant 0 : index
    %c0_2 = arith.constant 0 : index
    %2 = vector.load %arg2[%c0_1, %c0_2] : memref<1x1024xf32, #tpu.memory_space<vmem>>, vector<1x1024xf32>
    %3 = vector.broadcast %2 : vector<1x1024xf32> to vector<8x1024xf32>
    %4 = arith.mulf %1, %3 : vector<8x1024xf32>
    %c0_3 = arith.constant 0 : index
    %c0_4 = arith.constant 0 : index
    %5 = vector.load %arg3[%c0_3, %c0_4] : memref<1x1024xf32, #tpu.memory_space<vmem>>, vector<1x1024xf32>
    %6 = vector.broadcast %5 : vector<1x1024xf32> to vector<8x1024xf32>
    %7 = arith.addf %4, %6 : vector<8x1024xf32>
    %cst = arith.constant 0.000000e+00 : f32
    %8 = vector.broadcast %cst : f32 to vector<8x1024xf32>
    %9 = arith.maximumf %7, %8 : vector<8x1024xf32>
    %10 = arith.truncf %9 : vector<8x1024xf32> to vector<8x1024xbf16>
    %c0_5 = arith.constant 0 : index
    %c0_6 = arith.constant 0 : index
    %11 = vector.load %arg4[%c0_5, %c0_6] : memref<1024x64xbf16, #tpu.memory_space<vmem>>, vector<1024x64xbf16>
    %cst_7 = arith.constant dense<0.000000e+00> : vector<8x64xf32>
    %12 = tpu.matmul %10, %11, %cst_7 {dimension_numbers = #tpu.dot_dimension_numbers<[1], [0], [0], [1], [0, 0, 1, 1], [], []>} : vector<8x1024xbf16>, vector<1024x64xbf16>, vector<8x64xf32> -> vector<8x64xf32>
    %c0_8 = arith.constant 0 : index
    %c0_9 = arith.constant 0 : index
    %13 = vector.load %arg5[%c0_8, %c0_9] : memref<1x64xf32, #tpu.memory_space<vmem>>, vector<1x64xf32>
    %14 = vector.broadcast %13 : vector<1x64xf32> to vector<8x64xf32>
    %15 = arith.addf %12, %14 : vector<8x64xf32>
    %cst_10 = arith.constant 0.000000e+00 : f32
    %16 = vector.broadcast %cst_10 : f32 to vector<8x64xf32>
    %17 = arith.maximumf %15, %16 : vector<8x64xf32>
    %c0_11 = arith.constant 0 : index
    %c0_12 = arith.constant 0 : index
    %18 = vector.load %arg6[%c0_11, %c0_12] : memref<64x8xf32, #tpu.memory_space<vmem>>, vector<64x8xf32>
    %cst_13 = arith.constant dense<0.000000e+00> : vector<8x8xf32>
    %19 = tpu.matmul %18, %17, %cst_13 {dimension_numbers = #tpu.dot_dimension_numbers<[0], [1], [1], [0], [0, 1, 1, 0], [], []>} : vector<64x8xf32>, vector<8x64xf32>, vector<8x8xf32> -> vector<8x8xf32>
    %c0_14 = arith.constant 0 : index
    %c0_15 = arith.constant 0 : index
    %20 = vector.load %arg7[%c0_14, %c0_15] : memref<8x8xf32, #tpu.memory_space<vmem>>, vector<8x8xf32>
    tpu.vector_store %arg7[%c0_14, %c0_15], %19 {strides = array<i32>} : memref<8x8xf32, #tpu.memory_space<vmem>>, vector<8x8xf32>,
    return
  }
  func.func @transform_0(%arg0: i32) -> (i32, i32) {
    %c0_i32 = arith.constant 0 : i32
    %c0_i32_0 = arith.constant 0 : i32
    return %arg0, %c0_i32 : i32, i32
  }
  func.func @transform_1(%arg0: i32) -> (i32, i32) {
    %c0_i32 = arith.constant 0 : i32
    %c0_i32_0 = arith.constant 0 : i32
    %c0_i32_1 = arith.constant 0 : i32
    return %c0_i32, %c0_i32_0 : i32, i32
  }
  func.func @transform_2(%arg0: i32) -> (i32, i32) {
    %c0_i32 = arith.constant 0 : i32
    %c0_i32_0 = arith.constant 0 : i32
    %c0_i32_1 = arith.constant 0 : i32
    return %c0_i32, %c0_i32_0 : i32, i32
  }
  func.func @transform_3(%arg0: i32) -> (i32, i32) {
    %c0_i32 = arith.constant 0 : i32
    %c0_i32_0 = arith.constant 0 : i32
    %c0_i32_1 = arith.constant 0 : i32
    return %c0_i32, %c0_i32_0 : i32, i32
  }
  func.func @transform_4(%arg0: i32) -> (i32, i32) {
    %c0_i32 = arith.constant 0 : i32
    %c0_i32_0 = arith.constant 0 : i32
    %c0_i32_1 = arith.constant 0 : i32
    return %c0_i32, %c0_i32_0 : i32, i32
  }
  func.func @transform_5(%arg0: i32) -> (i32, i32) {
    %c0_i32 = arith.constant 0 : i32
    %c0_i32_0 = arith.constant 0 : i32
    %c0_i32_1 = arith.constant 0 : i32
    return %c0_i32, %c0_i32_0 : i32, i32
  }
  func.func @transform_6(%arg0: i32) -> (i32, i32) {
    %c0_i32 = arith.constant 0 : i32
    %c0_i32_0 = arith.constant 0 : i32
    return %c0_i32, %arg0 : i32, i32
  }
}

module attributes {stable_mosaic.version = 11 : i64} {
  func.func @upsample_kernel(%arg0: i32, %arg1: i32, %arg2: memref<1x16x2xf32, #tpu.memory_space<vmem>>, %arg3: memref<1x3x32x64xf32, #tpu.memory_space<vmem>>, %arg4: memref<32x2xf32, #tpu.memory_space<vmem>>, %arg5: memref<2x64xf32, #tpu.memory_space<vmem>>, %arg6: memref<3x8xf32, #tpu.memory_space<smem>>, %arg7: memref<1x8xf32, #tpu.memory_space<smem>>, %arg8: memref<1x8x32x64xf32, #tpu.memory_space<vmem>>) attributes {dimension_semantics = [#tpu.dimension_semantics<parallel>, #tpu.dimension_semantics<parallel>], iteration_bounds = array<i64: 2, 2>, scalar_prefetch = 0 : i64, scratch_operands = 0 : i64, tpu.core_type = #tpu.core_type<tc>, window_params = [{transform_indices = @transform_0, window_bounds = array<i64: 1, 16, 2>}, {transform_indices = @transform_1, window_bounds = array<i64: 1, 3, 32, 64>}, {transform_indices = @transform_2, window_bounds = array<i64: 32, 2>}, {pipeline_mode = #tpu.pipeline_mode<synchronous>, transform_indices = @transform_3, window_bounds = array<i64: 2, 64>}, {transform_indices = @transform_4, window_bounds = array<i64: 3, 8>}, {transform_indices = @transform_5, window_bounds = array<i64: 1, 8>}, {transform_indices = @transform_6, window_bounds = array<i64: 1, 8, 32, 64>}]} {
    %c0 = arith.constant 0 : index
    %c0_0 = arith.constant 0 : index
    %0 = vector.load %arg5[%c0, %c0_0] : memref<2x64xf32, #tpu.memory_space<vmem>>, vector<2x64xf32>
    %c0_1 = arith.constant 0 : index
    %c0_2 = arith.constant 0 : index
    %1 = vector.load %arg4[%c0_1, %c0_2] : memref<32x2xf32, #tpu.memory_space<vmem>>, vector<32x2xf32>
    %c0_3 = arith.constant 0 : index
    %c0_4 = arith.constant 0 : index
    %c0_5 = arith.constant 0 : index
    %2 = vector.load %arg2[%c0_3, %c0_4, %c0_5] : memref<1x16x2xf32, #tpu.memory_space<vmem>>, vector<1x16x2xf32>
    %3 = vector.shape_cast %2 : vector<1x16x2xf32> to vector<16x2xf32>
    %cst = arith.constant dense<0.000000e+00> : vector<16x64xf32>
    %4 = tpu.matmul %3, %0, %cst {dimension_numbers = #tpu.dot_dimension_numbers<[1], [0], [0], [1], [0, 0, 1, 1], [], []>} : vector<16x2xf32>, vector<2x64xf32>, vector<16x64xf32> -> vector<16x64xf32>
    %c0_6 = arith.constant 0 : index
    %c0_7 = arith.constant 0 : index
    %c0_8 = arith.constant 0 : index
    %c0_9 = arith.constant 0 : index
    %5 = vector.load %arg3[%c0_6, %c0_7, %c0_8, %c0_9] : memref<1x3x32x64xf32, #tpu.memory_space<vmem>>, vector<1x3x32x64xf32>
    %6 = vector.shape_cast %5 : vector<1x3x32x64xf32> to vector<3x32x64xf32>
    %7 = vector.extract_strided_slice %6 {offsets = [0, 0, 0], sizes = [1, 32, 64], strides = [1, 1, 1]} : vector<3x32x64xf32> to vector<1x32x64xf32>
    %8 = vector.shape_cast %7 : vector<1x32x64xf32> to vector<32x64xf32>
    %9 = vector.extract_strided_slice %6 {offsets = [1, 0, 0], sizes = [1, 32, 64], strides = [1, 1, 1]} : vector<3x32x64xf32> to vector<1x32x64xf32>
    %10 = vector.shape_cast %9 : vector<1x32x64xf32> to vector<32x64xf32>
    %11 = vector.extract_strided_slice %6 {offsets = [2, 0, 0], sizes = [1, 32, 64], strides = [1, 1, 1]} : vector<3x32x64xf32> to vector<1x32x64xf32>
    %12 = vector.shape_cast %11 : vector<1x32x64xf32> to vector<32x64xf32>
    %13 = vector.extract_strided_slice %4 {offsets = [0, 0], sizes = [2, 64], strides = [1, 1]} : vector<16x64xf32> to vector<2x64xf32>
    %cst_10 = arith.constant dense<0.000000e+00> : vector<32x64xf32>
    %14 = tpu.matmul %1, %13, %cst_10 {dimension_numbers = #tpu.dot_dimension_numbers<[1], [0], [0], [1], [0, 0, 1, 1], [], []>} : vector<32x2xf32>, vector<2x64xf32>, vector<32x64xf32> -> vector<32x64xf32>
    %c0_11 = arith.constant 0 : index
    %c0_12 = arith.constant 0 : index
    %15 = memref.load %arg6[%c0_11, %c0_12] : memref<3x8xf32, #tpu.memory_space<smem>>
    %16 = vector.broadcast %15 : f32 to vector<32x64xf32>
    %17 = arith.mulf %8, %16 : vector<32x64xf32>
    %c1 = arith.constant 1 : index
    %c0_13 = arith.constant 0 : index
    %18 = memref.load %arg6[%c1, %c0_13] : memref<3x8xf32, #tpu.memory_space<smem>>
    %19 = vector.broadcast %18 : f32 to vector<32x64xf32>
    %20 = arith.mulf %10, %19 : vector<32x64xf32>
    %21 = arith.addf %17, %20 : vector<32x64xf32>
    %c2 = arith.constant 2 : index
    %c0_14 = arith.constant 0 : index
    %22 = memref.load %arg6[%c2, %c0_14] : memref<3x8xf32, #tpu.memory_space<smem>>
    %23 = vector.broadcast %22 : f32 to vector<32x64xf32>
    %24 = arith.mulf %12, %23 : vector<32x64xf32>
    %25 = arith.addf %21, %24 : vector<32x64xf32>
    %c0_15 = arith.constant 0 : index
    %c0_16 = arith.constant 0 : index
    %26 = memref.load %arg7[%c0_15, %c0_16] : memref<1x8xf32, #tpu.memory_space<smem>>
    %27 = vector.broadcast %26 : f32 to vector<32x64xf32>
    %28 = arith.addf %25, %27 : vector<32x64xf32>
    %29 = arith.addf %14, %28 : vector<32x64xf32>
    %30 = arith.mulf %29, %8 : vector<32x64xf32>
    %c0_17 = arith.constant 0 : index
    %c0_18 = arith.constant 0 : index
    %c0_19 = arith.constant 0 : index
    %c0_20 = arith.constant 0 : index
    %31 = vector.load %arg8[%c0_17, %c0_18, %c0_19, %c0_20] : memref<1x8x32x64xf32, #tpu.memory_space<vmem>>, vector<1x1x32x64xf32>
    %32 = vector.shape_cast %31 : vector<1x1x32x64xf32> to vector<32x64xf32>
    %33 = vector.shape_cast %30 : vector<32x64xf32> to vector<1x1x32x64xf32>
    tpu.vector_store %arg8[%c0_17, %c0_18, %c0_19, %c0_20], %33 {strides = array<i32>} : memref<1x8x32x64xf32, #tpu.memory_space<vmem>>, vector<1x1x32x64xf32>,
    %34 = vector.extract_strided_slice %4 {offsets = [2, 0], sizes = [2, 64], strides = [1, 1]} : vector<16x64xf32> to vector<2x64xf32>
    %cst_21 = arith.constant dense<0.000000e+00> : vector<32x64xf32>
    %35 = tpu.matmul %1, %34, %cst_21 {dimension_numbers = #tpu.dot_dimension_numbers<[1], [0], [0], [1], [0, 0, 1, 1], [], []>} : vector<32x2xf32>, vector<2x64xf32>, vector<32x64xf32> -> vector<32x64xf32>
    %c0_22 = arith.constant 0 : index
    %c1_23 = arith.constant 1 : index
    %36 = memref.load %arg6[%c0_22, %c1_23] : memref<3x8xf32, #tpu.memory_space<smem>>
    %37 = vector.broadcast %36 : f32 to vector<32x64xf32>
    %38 = arith.mulf %8, %37 : vector<32x64xf32>
    %c1_24 = arith.constant 1 : index
    %c1_25 = arith.constant 1 : index
    %39 = memref.load %arg6[%c1_24, %c1_25] : memref<3x8xf32, #tpu.memory_space<smem>>
    %40 = vector.broadcast %39 : f32 to vector<32x64xf32>
    %41 = arith.mulf %10, %40 : vector<32x64xf32>
    %42 = arith.addf %38, %41 : vector<32x64xf32>
    %c2_26 = arith.constant 2 : index
    %c1_27 = arith.constant 1 : index
    %43 = memref.load %arg6[%c2_26, %c1_27] : memref<3x8xf32, #tpu.memory_space<smem>>
    %44 = vector.broadcast %43 : f32 to vector<32x64xf32>
    %45 = arith.mulf %12, %44 : vector<32x64xf32>
    %46 = arith.addf %42, %45 : vector<32x64xf32>
    %c0_28 = arith.constant 0 : index
    %c1_29 = arith.constant 1 : index
    %47 = memref.load %arg7[%c0_28, %c1_29] : memref<1x8xf32, #tpu.memory_space<smem>>
    %48 = vector.broadcast %47 : f32 to vector<32x64xf32>
    %49 = arith.addf %46, %48 : vector<32x64xf32>
    %50 = arith.addf %35, %49 : vector<32x64xf32>
    %51 = arith.mulf %50, %8 : vector<32x64xf32>
    %c0_30 = arith.constant 0 : index
    %c1_31 = arith.constant 1 : index
    %c0_32 = arith.constant 0 : index
    %c0_33 = arith.constant 0 : index
    %52 = vector.load %arg8[%c0_30, %c1_31, %c0_32, %c0_33] : memref<1x8x32x64xf32, #tpu.memory_space<vmem>>, vector<1x1x32x64xf32>
    %53 = vector.shape_cast %52 : vector<1x1x32x64xf32> to vector<32x64xf32>
    %54 = vector.shape_cast %51 : vector<32x64xf32> to vector<1x1x32x64xf32>
    tpu.vector_store %arg8[%c0_30, %c1_31, %c0_32, %c0_33], %54 {strides = array<i32>} : memref<1x8x32x64xf32, #tpu.memory_space<vmem>>, vector<1x1x32x64xf32>,
    %55 = vector.extract_strided_slice %4 {offsets = [4, 0], sizes = [2, 64], strides = [1, 1]} : vector<16x64xf32> to vector<2x64xf32>
    %cst_34 = arith.constant dense<0.000000e+00> : vector<32x64xf32>
    %56 = tpu.matmul %1, %55, %cst_34 {dimension_numbers = #tpu.dot_dimension_numbers<[1], [0], [0], [1], [0, 0, 1, 1], [], []>} : vector<32x2xf32>, vector<2x64xf32>, vector<32x64xf32> -> vector<32x64xf32>
    %c0_35 = arith.constant 0 : index
    %c2_36 = arith.constant 2 : index
    %57 = memref.load %arg6[%c0_35, %c2_36] : memref<3x8xf32, #tpu.memory_space<smem>>
    %58 = vector.broadcast %57 : f32 to vector<32x64xf32>
    %59 = arith.mulf %8, %58 : vector<32x64xf32>
    %c1_37 = arith.constant 1 : index
    %c2_38 = arith.constant 2 : index
    %60 = memref.load %arg6[%c1_37, %c2_38] : memref<3x8xf32, #tpu.memory_space<smem>>
    %61 = vector.broadcast %60 : f32 to vector<32x64xf32>
    %62 = arith.mulf %10, %61 : vector<32x64xf32>
    %63 = arith.addf %59, %62 : vector<32x64xf32>
    %c2_39 = arith.constant 2 : index
    %c2_40 = arith.constant 2 : index
    %64 = memref.load %arg6[%c2_39, %c2_40] : memref<3x8xf32, #tpu.memory_space<smem>>
    %65 = vector.broadcast %64 : f32 to vector<32x64xf32>
    %66 = arith.mulf %12, %65 : vector<32x64xf32>
    %67 = arith.addf %63, %66 : vector<32x64xf32>
    %c0_41 = arith.constant 0 : index
    %c2_42 = arith.constant 2 : index
    %68 = memref.load %arg7[%c0_41, %c2_42] : memref<1x8xf32, #tpu.memory_space<smem>>
    %69 = vector.broadcast %68 : f32 to vector<32x64xf32>
    %70 = arith.addf %67, %69 : vector<32x64xf32>
    %71 = arith.addf %56, %70 : vector<32x64xf32>
    %72 = arith.mulf %71, %8 : vector<32x64xf32>
    %c0_43 = arith.constant 0 : index
    %c2_44 = arith.constant 2 : index
    %c0_45 = arith.constant 0 : index
    %c0_46 = arith.constant 0 : index
    %73 = vector.load %arg8[%c0_43, %c2_44, %c0_45, %c0_46] : memref<1x8x32x64xf32, #tpu.memory_space<vmem>>, vector<1x1x32x64xf32>
    %74 = vector.shape_cast %73 : vector<1x1x32x64xf32> to vector<32x64xf32>
    %75 = vector.shape_cast %72 : vector<32x64xf32> to vector<1x1x32x64xf32>
    tpu.vector_store %arg8[%c0_43, %c2_44, %c0_45, %c0_46], %75 {strides = array<i32>} : memref<1x8x32x64xf32, #tpu.memory_space<vmem>>, vector<1x1x32x64xf32>,
    %76 = vector.extract_strided_slice %4 {offsets = [6, 0], sizes = [2, 64], strides = [1, 1]} : vector<16x64xf32> to vector<2x64xf32>
    %cst_47 = arith.constant dense<0.000000e+00> : vector<32x64xf32>
    %77 = tpu.matmul %1, %76, %cst_47 {dimension_numbers = #tpu.dot_dimension_numbers<[1], [0], [0], [1], [0, 0, 1, 1], [], []>} : vector<32x2xf32>, vector<2x64xf32>, vector<32x64xf32> -> vector<32x64xf32>
    %c0_48 = arith.constant 0 : index
    %c3 = arith.constant 3 : index
    %78 = memref.load %arg6[%c0_48, %c3] : memref<3x8xf32, #tpu.memory_space<smem>>
    %79 = vector.broadcast %78 : f32 to vector<32x64xf32>
    %80 = arith.mulf %8, %79 : vector<32x64xf32>
    %c1_49 = arith.constant 1 : index
    %c3_50 = arith.constant 3 : index
    %81 = memref.load %arg6[%c1_49, %c3_50] : memref<3x8xf32, #tpu.memory_space<smem>>
    %82 = vector.broadcast %81 : f32 to vector<32x64xf32>
    %83 = arith.mulf %10, %82 : vector<32x64xf32>
    %84 = arith.addf %80, %83 : vector<32x64xf32>
    %c2_51 = arith.constant 2 : index
    %c3_52 = arith.constant 3 : index
    %85 = memref.load %arg6[%c2_51, %c3_52] : memref<3x8xf32, #tpu.memory_space<smem>>
    %86 = vector.broadcast %85 : f32 to vector<32x64xf32>
    %87 = arith.mulf %12, %86 : vector<32x64xf32>
    %88 = arith.addf %84, %87 : vector<32x64xf32>
    %c0_53 = arith.constant 0 : index
    %c3_54 = arith.constant 3 : index
    %89 = memref.load %arg7[%c0_53, %c3_54] : memref<1x8xf32, #tpu.memory_space<smem>>
    %90 = vector.broadcast %89 : f32 to vector<32x64xf32>
    %91 = arith.addf %88, %90 : vector<32x64xf32>
    %92 = arith.addf %77, %91 : vector<32x64xf32>
    %93 = arith.mulf %92, %8 : vector<32x64xf32>
    %c0_55 = arith.constant 0 : index
    %c3_56 = arith.constant 3 : index
    %c0_57 = arith.constant 0 : index
    %c0_58 = arith.constant 0 : index
    %94 = vector.load %arg8[%c0_55, %c3_56, %c0_57, %c0_58] : memref<1x8x32x64xf32, #tpu.memory_space<vmem>>, vector<1x1x32x64xf32>
    %95 = vector.shape_cast %94 : vector<1x1x32x64xf32> to vector<32x64xf32>
    %96 = vector.shape_cast %93 : vector<32x64xf32> to vector<1x1x32x64xf32>
    tpu.vector_store %arg8[%c0_55, %c3_56, %c0_57, %c0_58], %96 {strides = array<i32>} : memref<1x8x32x64xf32, #tpu.memory_space<vmem>>, vector<1x1x32x64xf32>,
    %97 = vector.extract_strided_slice %4 {offsets = [8, 0], sizes = [2, 64], strides = [1, 1]} : vector<16x64xf32> to vector<2x64xf32>
    %cst_59 = arith.constant dense<0.000000e+00> : vector<32x64xf32>
    %98 = tpu.matmul %1, %97, %cst_59 {dimension_numbers = #tpu.dot_dimension_numbers<[1], [0], [0], [1], [0, 0, 1, 1], [], []>} : vector<32x2xf32>, vector<2x64xf32>, vector<32x64xf32> -> vector<32x64xf32>
    %c0_60 = arith.constant 0 : index
    %c4 = arith.constant 4 : index
    %99 = memref.load %arg6[%c0_60, %c4] : memref<3x8xf32, #tpu.memory_space<smem>>
    %100 = vector.broadcast %99 : f32 to vector<32x64xf32>
    %101 = arith.mulf %8, %100 : vector<32x64xf32>
    %c1_61 = arith.constant 1 : index
    %c4_62 = arith.constant 4 : index
    %102 = memref.load %arg6[%c1_61, %c4_62] : memref<3x8xf32, #tpu.memory_space<smem>>
    %103 = vector.broadcast %102 : f32 to vector<32x64xf32>
    %104 = arith.mulf %10, %103 : vector<32x64xf32>
    %105 = arith.addf %101, %104 : vector<32x64xf32>
    %c2_63 = arith.constant 2 : index
    %c4_64 = arith.constant 4 : index
    %106 = memref.load %arg6[%c2_63, %c4_64] : memref<3x8xf32, #tpu.memory_space<smem>>
    %107 = vector.broadcast %106 : f32 to vector<32x64xf32>
    %108 = arith.mulf %12, %107 : vector<32x64xf32>
    %109 = arith.addf %105, %108 : vector<32x64xf32>
    %c0_65 = arith.constant 0 : index
    %c4_66 = arith.constant 4 : index
    %110 = memref.load %arg7[%c0_65, %c4_66] : memref<1x8xf32, #tpu.memory_space<smem>>
    %111 = vector.broadcast %110 : f32 to vector<32x64xf32>
    %112 = arith.addf %109, %111 : vector<32x64xf32>
    %113 = arith.addf %98, %112 : vector<32x64xf32>
    %114 = arith.mulf %113, %8 : vector<32x64xf32>
    %c0_67 = arith.constant 0 : index
    %c4_68 = arith.constant 4 : index
    %c0_69 = arith.constant 0 : index
    %c0_70 = arith.constant 0 : index
    %115 = vector.load %arg8[%c0_67, %c4_68, %c0_69, %c0_70] : memref<1x8x32x64xf32, #tpu.memory_space<vmem>>, vector<1x1x32x64xf32>
    %116 = vector.shape_cast %115 : vector<1x1x32x64xf32> to vector<32x64xf32>
    %117 = vector.shape_cast %114 : vector<32x64xf32> to vector<1x1x32x64xf32>
    tpu.vector_store %arg8[%c0_67, %c4_68, %c0_69, %c0_70], %117 {strides = array<i32>} : memref<1x8x32x64xf32, #tpu.memory_space<vmem>>, vector<1x1x32x64xf32>,
    %118 = vector.extract_strided_slice %4 {offsets = [10, 0], sizes = [2, 64], strides = [1, 1]} : vector<16x64xf32> to vector<2x64xf32>
    %cst_71 = arith.constant dense<0.000000e+00> : vector<32x64xf32>
    %119 = tpu.matmul %1, %118, %cst_71 {dimension_numbers = #tpu.dot_dimension_numbers<[1], [0], [0], [1], [0, 0, 1, 1], [], []>} : vector<32x2xf32>, vector<2x64xf32>, vector<32x64xf32> -> vector<32x64xf32>
    %c0_72 = arith.constant 0 : index
    %c5 = arith.constant 5 : index
    %120 = memref.load %arg6[%c0_72, %c5] : memref<3x8xf32, #tpu.memory_space<smem>>
    %121 = vector.broadcast %120 : f32 to vector<32x64xf32>
    %122 = arith.mulf %8, %121 : vector<32x64xf32>
    %c1_73 = arith.constant 1 : index
    %c5_74 = arith.constant 5 : index
    %123 = memref.load %arg6[%c1_73, %c5_74] : memref<3x8xf32, #tpu.memory_space<smem>>
    %124 = vector.broadcast %123 : f32 to vector<32x64xf32>
    %125 = arith.mulf %10, %124 : vector<32x64xf32>
    %126 = arith.addf %122, %125 : vector<32x64xf32>
    %c2_75 = arith.constant 2 : index
    %c5_76 = arith.constant 5 : index
    %127 = memref.load %arg6[%c2_75, %c5_76] : memref<3x8xf32, #tpu.memory_space<smem>>
    %128 = vector.broadcast %127 : f32 to vector<32x64xf32>
    %129 = arith.mulf %12, %128 : vector<32x64xf32>
    %130 = arith.addf %126, %129 : vector<32x64xf32>
    %c0_77 = arith.constant 0 : index
    %c5_78 = arith.constant 5 : index
    %131 = memref.load %arg7[%c0_77, %c5_78] : memref<1x8xf32, #tpu.memory_space<smem>>
    %132 = vector.broadcast %131 : f32 to vector<32x64xf32>
    %133 = arith.addf %130, %132 : vector<32x64xf32>
    %134 = arith.addf %119, %133 : vector<32x64xf32>
    %135 = arith.mulf %134, %8 : vector<32x64xf32>
    %c0_79 = arith.constant 0 : index
    %c5_80 = arith.constant 5 : index
    %c0_81 = arith.constant 0 : index
    %c0_82 = arith.constant 0 : index
    %136 = vector.load %arg8[%c0_79, %c5_80, %c0_81, %c0_82] : memref<1x8x32x64xf32, #tpu.memory_space<vmem>>, vector<1x1x32x64xf32>
    %137 = vector.shape_cast %136 : vector<1x1x32x64xf32> to vector<32x64xf32>
    %138 = vector.shape_cast %135 : vector<32x64xf32> to vector<1x1x32x64xf32>
    tpu.vector_store %arg8[%c0_79, %c5_80, %c0_81, %c0_82], %138 {strides = array<i32>} : memref<1x8x32x64xf32, #tpu.memory_space<vmem>>, vector<1x1x32x64xf32>,
    %139 = vector.extract_strided_slice %4 {offsets = [12, 0], sizes = [2, 64], strides = [1, 1]} : vector<16x64xf32> to vector<2x64xf32>
    %cst_83 = arith.constant dense<0.000000e+00> : vector<32x64xf32>
    %140 = tpu.matmul %1, %139, %cst_83 {dimension_numbers = #tpu.dot_dimension_numbers<[1], [0], [0], [1], [0, 0, 1, 1], [], []>} : vector<32x2xf32>, vector<2x64xf32>, vector<32x64xf32> -> vector<32x64xf32>
    %c0_84 = arith.constant 0 : index
    %c6 = arith.constant 6 : index
    %141 = memref.load %arg6[%c0_84, %c6] : memref<3x8xf32, #tpu.memory_space<smem>>
    %142 = vector.broadcast %141 : f32 to vector<32x64xf32>
    %143 = arith.mulf %8, %142 : vector<32x64xf32>
    %c1_85 = arith.constant 1 : index
    %c6_86 = arith.constant 6 : index
    %144 = memref.load %arg6[%c1_85, %c6_86] : memref<3x8xf32, #tpu.memory_space<smem>>
    %145 = vector.broadcast %144 : f32 to vector<32x64xf32>
    %146 = arith.mulf %10, %145 : vector<32x64xf32>
    %147 = arith.addf %143, %146 : vector<32x64xf32>
    %c2_87 = arith.constant 2 : index
    %c6_88 = arith.constant 6 : index
    %148 = memref.load %arg6[%c2_87, %c6_88] : memref<3x8xf32, #tpu.memory_space<smem>>
    %149 = vector.broadcast %148 : f32 to vector<32x64xf32>
    %150 = arith.mulf %12, %149 : vector<32x64xf32>
    %151 = arith.addf %147, %150 : vector<32x64xf32>
    %c0_89 = arith.constant 0 : index
    %c6_90 = arith.constant 6 : index
    %152 = memref.load %arg7[%c0_89, %c6_90] : memref<1x8xf32, #tpu.memory_space<smem>>
    %153 = vector.broadcast %152 : f32 to vector<32x64xf32>
    %154 = arith.addf %151, %153 : vector<32x64xf32>
    %155 = arith.addf %140, %154 : vector<32x64xf32>
    %156 = arith.mulf %155, %8 : vector<32x64xf32>
    %c0_91 = arith.constant 0 : index
    %c6_92 = arith.constant 6 : index
    %c0_93 = arith.constant 0 : index
    %c0_94 = arith.constant 0 : index
    %157 = vector.load %arg8[%c0_91, %c6_92, %c0_93, %c0_94] : memref<1x8x32x64xf32, #tpu.memory_space<vmem>>, vector<1x1x32x64xf32>
    %158 = vector.shape_cast %157 : vector<1x1x32x64xf32> to vector<32x64xf32>
    %159 = vector.shape_cast %156 : vector<32x64xf32> to vector<1x1x32x64xf32>
    tpu.vector_store %arg8[%c0_91, %c6_92, %c0_93, %c0_94], %159 {strides = array<i32>} : memref<1x8x32x64xf32, #tpu.memory_space<vmem>>, vector<1x1x32x64xf32>,
    %160 = vector.extract_strided_slice %4 {offsets = [14, 0], sizes = [2, 64], strides = [1, 1]} : vector<16x64xf32> to vector<2x64xf32>
    %cst_95 = arith.constant dense<0.000000e+00> : vector<32x64xf32>
    %161 = tpu.matmul %1, %160, %cst_95 {dimension_numbers = #tpu.dot_dimension_numbers<[1], [0], [0], [1], [0, 0, 1, 1], [], []>} : vector<32x2xf32>, vector<2x64xf32>, vector<32x64xf32> -> vector<32x64xf32>
    %c0_96 = arith.constant 0 : index
    %c7 = arith.constant 7 : index
    %162 = memref.load %arg6[%c0_96, %c7] : memref<3x8xf32, #tpu.memory_space<smem>>
    %163 = vector.broadcast %162 : f32 to vector<32x64xf32>
    %164 = arith.mulf %8, %163 : vector<32x64xf32>
    %c1_97 = arith.constant 1 : index
    %c7_98 = arith.constant 7 : index
    %165 = memref.load %arg6[%c1_97, %c7_98] : memref<3x8xf32, #tpu.memory_space<smem>>
    %166 = vector.broadcast %165 : f32 to vector<32x64xf32>
    %167 = arith.mulf %10, %166 : vector<32x64xf32>
    %168 = arith.addf %164, %167 : vector<32x64xf32>
    %c2_99 = arith.constant 2 : index
    %c7_100 = arith.constant 7 : index
    %169 = memref.load %arg6[%c2_99, %c7_100] : memref<3x8xf32, #tpu.memory_space<smem>>
    %170 = vector.broadcast %169 : f32 to vector<32x64xf32>
    %171 = arith.mulf %12, %170 : vector<32x64xf32>
    %172 = arith.addf %168, %171 : vector<32x64xf32>
    %c0_101 = arith.constant 0 : index
    %c7_102 = arith.constant 7 : index
    %173 = memref.load %arg7[%c0_101, %c7_102] : memref<1x8xf32, #tpu.memory_space<smem>>
    %174 = vector.broadcast %173 : f32 to vector<32x64xf32>
    %175 = arith.addf %172, %174 : vector<32x64xf32>
    %176 = arith.addf %161, %175 : vector<32x64xf32>
    %177 = arith.mulf %176, %8 : vector<32x64xf32>
    %c0_103 = arith.constant 0 : index
    %c7_104 = arith.constant 7 : index
    %c0_105 = arith.constant 0 : index
    %c0_106 = arith.constant 0 : index
    %178 = vector.load %arg8[%c0_103, %c7_104, %c0_105, %c0_106] : memref<1x8x32x64xf32, #tpu.memory_space<vmem>>, vector<1x1x32x64xf32>
    %179 = vector.shape_cast %178 : vector<1x1x32x64xf32> to vector<32x64xf32>
    %180 = vector.shape_cast %177 : vector<32x64xf32> to vector<1x1x32x64xf32>
    tpu.vector_store %arg8[%c0_103, %c7_104, %c0_105, %c0_106], %180 {strides = array<i32>} : memref<1x8x32x64xf32, #tpu.memory_space<vmem>>, vector<1x1x32x64xf32>,
    return
  }
  func.func @transform_0(%arg0: i32, %arg1: i32) -> (i32, i32, i32) {
    %c0_i32 = arith.constant 0 : i32
    %c0_i32_0 = arith.constant 0 : i32
    %c0_i32_1 = arith.constant 0 : i32
    return %arg0, %c0_i32, %c0_i32_0 : i32, i32, i32
  }
  func.func @transform_1(%arg0: i32, %arg1: i32) -> (i32, i32, i32, i32) {
    %c0_i32 = arith.constant 0 : i32
    %c0_i32_0 = arith.constant 0 : i32
    %c0_i32_1 = arith.constant 0 : i32
    return %arg0, %c0_i32, %arg1, %c0_i32_0 : i32, i32, i32, i32
  }
  func.func @transform_2(%arg0: i32, %arg1: i32) -> (i32, i32) {
    %c0_i32 = arith.constant 0 : i32
    %c0_i32_0 = arith.constant 0 : i32
    return %arg1, %c0_i32 : i32, i32
  }
  func.func @transform_3(%arg0: i32, %arg1: i32) -> (i32, i32) {
    %c0_i32 = arith.constant 0 : i32
    %c0_i32_0 = arith.constant 0 : i32
    %c0_i32_1 = arith.constant 0 : i32
    return %c0_i32, %c0_i32_0 : i32, i32
  }
  func.func @transform_4(%arg0: i32, %arg1: i32) -> (i32, i32) {
    %c0_i32 = arith.constant 0 : i32
    %c0_i32_0 = arith.constant 0 : i32
    %c0_i32_1 = arith.constant 0 : i32
    return %c0_i32, %c0_i32_0 : i32, i32
  }
  func.func @transform_5(%arg0: i32, %arg1: i32) -> (i32, i32) {
    %c0_i32 = arith.constant 0 : i32
    %c0_i32_0 = arith.constant 0 : i32
    %c0_i32_1 = arith.constant 0 : i32
    return %c0_i32, %c0_i32_0 : i32, i32
  }
  func.func @transform_6(%arg0: i32, %arg1: i32) -> (i32, i32, i32, i32) {
    %c0_i32 = arith.constant 0 : i32
    %c0_i32_0 = arith.constant 0 : i32
    %c0_i32_1 = arith.constant 0 : i32
    return %arg0, %c0_i32, %arg1, %c0_i32_0 : i32, i32, i32, i32
  }
}

</mosaic_0001>

<llo_original>
// kernel: _net_forward.2
$region0: #{_net_forward.2}
  #allocation0 [shape = 'u32[]', space=smem, size = 0x4, offset = 0x4, fixed_abs, tag = 'smem constant byte address 0x4 - core index']
  #allocation1 [shape = 'u32[144,128]{1,0:T(1,128)}', space=vmem, size = 0x12000, scoped, tag = 'internal scratch']
  %s0 = inlined_call_operand.vmem [shape: bf16[8,1024], index: 0, kind: input, shape index: {}]
  %s1 = inlined_call_operand.vmem [shape: f32[1,1024], index: 1, kind: input, shape index: {}]
  %s2 = inlined_call_operand.vmem [shape: f32[1,1024], index: 2, kind: input, shape index: {}]
  %s3 = inlined_call_operand.vmem [shape: bf16[1024,64], index: 3, kind: input, shape index: {}]
  %s4 = inlined_call_operand.vmem [shape: f32[1,64], index: 4, kind: input, shape index: {}]
  %s5 = inlined_call_operand.vmem [shape: f32[64,8], index: 5, kind: input, shape index: {}]
  %s6 = inlined_call_operand.vmem [shape: f32[8,8], index: 6, kind: output, shape index: {}]
  %s7 = sld [smem:[#allocation0]]
  $region34: #{_net_forward.2} parent=0
    _
  %s9 = ssub.s32 1, %s7
  %s10 = scalar_select 0, %s9, %s7
  // Predicated region
  $region2: #{_net_forward.2} parent=0 // pred_check
    _
  $region3: #{_net_forward.2} parent=0 // pred_check_branch
    %12 = sbr.rel (0) target = $region5
  $region4: #{_net_forward.2} parent=0 // pred_region
    _
  $region5: #{_net_forward.2} parent=0 // pred_fallthru
    _
  // Predicated region
  $region6: #{_net_forward.2} parent=0 // pred_check
    _
  $region7: #{_net_forward.2} parent=0 // pred_check_branch
    %14 = sbr.rel (0) target = $region9
  $region8: #{_net_forward.2} parent=0 // pred_region
    _
  $region9: #{_net_forward.2} parent=0 // pred_fallthru
    _
  // Predicated region
  $region10: #{_net_forward.2} parent=0 // pred_check
    _
  $region11: #{_net_forward.2} parent=0 // pred_check_branch
    %16 = sbr.rel (0) target = $region13
  $region12: #{_net_forward.2} parent=0 // pred_region
    _
  $region13: #{_net_forward.2} parent=0 // pred_fallthru
    _
  // Predicated region
  $region14: #{_net_forward.2} parent=0 // pred_check
    _
  $region15: #{_net_forward.2} parent=0 // pred_check_branch
    %18 = sbr.rel (0) target = $region17
  $region16: #{_net_forward.2} parent=0 // pred_region
    _
  $region17: #{_net_forward.2} parent=0 // pred_fallthru
    _
  // Predicated region
  $region18: #{_net_forward.2} parent=0 // pred_check
    _
  $region19: #{_net_forward.2} parent=0 // pred_check_branch
    %20 = sbr.rel (0) target = $region21
  $region20: #{_net_forward.2} parent=0 // pred_region
    _
  $region21: #{_net_forward.2} parent=0 // pred_fallthru
    _
  // Predicated region
  $region22: #{_net_forward.2} parent=0 // pred_check
    _
  $region23: #{_net_forward.2} parent=0 // pred_check_branch
    %22 = sbr.rel (0) target = $region25
  $region24: #{_net_forward.2} parent=0 // pred_region
    _
  $region25: #{_net_forward.2} parent=0 // pred_fallthru
    _
  %v24 = vld [vmem:[%s0] sm:$0xff]
  %v25 = vld [vmem:[%s0 + $0x8] sm:$0xff]
  %v26 = vld [vmem:[%s0 + $0x10] sm:$0xff]
  %v27 = vld [vmem:[%s0 + $0x18] sm:$0xff]
  %v28 = vunpack.c.l.bf16 %v24
  %v29 = vunpack.c.h.bf16 %v24
  %v30 = vunpack.c.l.bf16 %v25
  %v31 = vunpack.c.h.bf16 %v25
  %v32 = vunpack.c.l.bf16 %v26
  %v33 = vunpack.c.h.bf16 %v26
  %v34 = vunpack.c.l.bf16 %v27
  %v35 = vunpack.c.h.bf16 %v27
  %v36 = vld [vmem:[%s1] sm:$0xff]
  %v38 = vlaneseq
  %v39 = vshrl.u32 %v38, 7
  %v40 = vsub.s32 0, %v39
  %v41 = vrot.slane %v36, %v40
  %v42 = vlaneseq
  %v43 = vshrl.u32 %v42, 7
  %v44 = vsub.s32 1, %v43
  %v45 = vrot.slane %v36, %v44
  %v46 = vlaneseq
  %v47 = vshrl.u32 %v46, 7
  %v48 = vsub.s32 2, %v47
  %v49 = vrot.slane %v36, %v48
  %v50 = vlaneseq
  %v51 = vshrl.u32 %v50, 7
  %v52 = vsub.s32 3, %v51
  %v53 = vrot.slane %v36, %v52
  %v54 = vlaneseq
  %v55 = vshrl.u32 %v54, 7
  %v56 = vsub.s32 4, %v55
  %v57 = vrot.slane %v36, %v56
  %v58 = vlaneseq
  %v59 = vshrl.u32 %v58, 7
  %v60 = vsub.s32 5, %v59
  %v61 = vrot.slane %v36, %v60
  %v62 = vlaneseq
  %v63 = vshrl.u32 %v62, 7
  %v64 = vsub.s32 6, %v63
  %v65 = vrot.slane %v36, %v64
  %v66 = vlaneseq
  %v67 = vshrl.u32 %v66, 7
  %v68 = vsub.s32 7, %v67
  %v69 = vrot.slane %v36, %v68
  %v78 = vmul.f32 %v28, %v41
  %v79 = vmul.f32 %v29, %v45
  %v80 = vmul.f32 %v30, %v49
  %v81 = vmul.f32 %v31, %v53
  %v82 = vmul.f32 %v32, %v57
  %v83 = vmul.f32 %v33, %v61
  %v84 = vmul.f32 %v34, %v65
  %v85 = vmul.f32 %v35, %v69
  %v86 = vld [vmem:[%s2] sm:$0xff]
  %v88 = vlaneseq
  %v89 = vshrl.u32 %v88, 7
  %v90 = vsub.s32 0, %v89
  %v91 = vrot.slane %v86, %v90
  %v92 = vlaneseq
  %v93 = vshrl.u32 %v92, 7
  %v94 = vsub.s32 1, %v93
  %v95 = vrot.slane %v86, %v94
  %v96 = vlaneseq
  %v97 = vshrl.u32 %v96, 7
  %v98 = vsub.s32 2, %v97
  %v99 = vrot.slane %v86, %v98
  %v100 = vlaneseq
  %v101 = vshrl.u32 %v100, 7
  %v102 = vsub.s32 3, %v101
  %v103 = vrot.slane %v86, %v102
  %v104 = vlaneseq
  %v105 = vshrl.u32 %v104, 7
  %v106 = vsub.s32 4, %v105
  %v107 = vrot.slane %v86, %v106
  %v108 = vlaneseq
  %v109 = vshrl.u32 %v108, 7
  %v110 = vsub.s32 5, %v109
  %v111 = vrot.slane %v86, %v110
  %v112 = vlaneseq
  %v113 = vshrl.u32 %v112, 7
  %v114 = vsub.s32 6, %v113
  %v115 = vrot.slane %v86, %v114
  %v116 = vlaneseq
  %v117 = vshrl.u32 %v116, 7
  %v118 = vsub.s32 7, %v117
  %v119 = vrot.slane %v86, %v118
  %v128 = vadd.f32 %v78, %v91
  %v129 = vadd.f32 %v79, %v95
  %v130 = vadd.f32 %v80, %v99
  %v131 = vadd.f32 %v81, %v103
  %v132 = vadd.f32 %v82, %v107
  %v133 = vadd.f32 %v83, %v111
  %v134 = vadd.f32 %v84, %v115
  %v135 = vadd.f32 %v85, %v119
  %v136 = vmax.f32 %v128, 0.0
  %v137 = vmax.f32 %v129, 0.0
  %v138 = vmax.f32 %v130, 0.0
  %v139 = vmax.f32 %v131, 0.0
  %v140 = vmax.f32 %v132, 0.0
  %v141 = vmax.f32 %v133, 0.0
  %v142 = vmax.f32 %v134, 0.0
  %v143 = vmax.f32 %v135, 0.0
  %v144 = vpack.c.bf16 %v136, %v136
  %v145 = vpack.c.bf16 %v137, %v137
  %v146 = vpack.c.bf16 %v138, %v138
  %v147 = vpack.c.bf16 %v139, %v139
  %v148 = vpack.c.bf16 %v140, %v140
  %v149 = vpack.c.bf16 %v141, %v141
  %v150 = vpack.c.bf16 %v142, %v142
  %v151 = vpack.c.bf16 %v143, %v143
  %v152 = vld [vmem:[%s3] sm:$0xf]
  %v153 = vld [vmem:[%s3 + $0x4] sm:$0xf]
  %v154 = vld [vmem:[%s3 + $0x8] sm:$0xf]
  %v155 = vld [vmem:[%s3 + $0xc] sm:$0xf]
  %v156 = vld [vmem:[%s3 + $0x10] sm:$0xf]
  %v157 = vld [vmem:[%s3 + $0x14] sm:$0xf]
  %v158 = vld [vmem:[%s3 + $0x18] sm:$0xf]
  %v159 = vld [vmem:[%s3 + $0x1c] sm:$0xf]
  %v160 = vld [vmem:[%s3 + $0x20] sm:$0xf]
  %v161 = vld [vmem:[%s3 + $0x24] sm:$0xf]
  %v162 = vld [vmem:[%s3 + $0x28] sm:$0xf]
  %v163 = vld [vmem:[%s3 + $0x2c] sm:$0xf]
  %v164 = vld [vmem:[%s3 + $0x30] sm:$0xf]
  %v165 = vld [vmem:[%s3 + $0x34] sm:$0xf]
  %v166 = vld [vmem:[%s3 + $0x38] sm:$0xf]
  %v167 = vld [vmem:[%s3 + $0x3c] sm:$0xf]
  %v168 = vld [vmem:[%s3 + $0x40] sm:$0xf]
  %v169 = vld [vmem:[%s3 + $0x44] sm:$0xf]
  %v170 = vld [vmem:[%s3 + $0x48] sm:$0xf]
  %v171 = vld [vmem:[%s3 + $0x4c] sm:$0xf]
  %v172 = vld [vmem:[%s3 + $0x50] sm:$0xf]
  %v173 = vld [vmem:[%s3 + $0x54] sm:$0xf]
  %v174 = vld [vmem:[%s3 + $0x58] sm:$0xf]
  %v175 = vld [vmem:[%s3 + $0x5c] sm:$0xf]
  %v176 = vld [vmem:[%s3 + $0x60] sm:$0xf]
  %v177 = vld [vmem:[%s3 + $0x64] sm:$0xf]
  %v178 = vld [vmem:[%s3 + $0x68] sm:$0xf]
  %v179 = vld [vmem:[%s3 + $0x6c] sm:$0xf]
  %v180 = vld [vmem:[%s3 + $0x70] sm:$0xf]
  %v181 = vld [vmem:[%s3 + $0x74] sm:$0xf]
  %v182 = vld [vmem:[%s3 + $0x78] sm:$0xf]
  %v183 = vld [vmem:[%s3 + $0x7c] sm:$0xf]
  %v184 = vld [vmem:[%s3 + $0x80] sm:$0xf]
  %v185 = vld [vmem:[%s3 + $0x84] sm:$0xf]
  %v186 = vld [vmem:[%s3 + $0x88] sm:$0xf]
  %v187 = vld [vmem:[%s3 + $0x8c] sm:$0xf]
  %v188 = vld [vmem:[%s3 + $0x90] sm:$0xf]
  %v189 = vld [vmem:[%s3 + $0x94] sm:$0xf]
  %v190 = vld [vmem:[%s3 + $0x98] sm:$0xf]
  %v191 = vld [vmem:[%s3 + $0x9c] sm:$0xf]
  %v192 = vld [vmem:[%s3 + $0xa0] sm:$0xf]
  %v193 = vld [vmem:[%s3 + $0xa4] sm:$0xf]
  %v194 = vld [vmem:[%s3 + $0xa8] sm:$0xf]
  %v195 = vld [vmem:[%s3 + $0xac] sm:$0xf]
  %v196 = vld [vmem:[%s3 + $0xb0] sm:$0xf]
  %v197 = vld [vmem:[%s3 + $0xb4] sm:$0xf]
  %v198 = vld [vmem:[%s3 + $0xb8] sm:$0xf]
  %v199 = vld [vmem:[%s3 + $0xbc] sm:$0xf]
  %v200 = vld [vmem:[%s3 + $0xc0] sm:$0xf]
  %v201 = vld [vmem:[%s3 + $0xc4] sm:$0xf]
  %v202 = vld [vmem:[%s3 + $0xc8] sm:$0xf]
  %v203 = vld [vmem:[%s3 + $0xcc] sm:$0xf]
  %v204 = vld [vmem:[%s3 + $0xd0] sm:$0xf]
  %v205 = vld [vmem:[%s3 + $0xd4] sm:$0xf]
  %v206 = vld [vmem:[%s3 + $0xd8] sm:$0xf]
  %v207 = vld [vmem:[%s3 + $0xdc] sm:$0xf]
  %v208 = vld [vmem:[%s3 + $0xe0] sm:$0xf]
  %v209 = vld [vmem:[%s3 + $0xe4] sm:$0xf]
  %v210 = vld [vmem:[%s3 + $0xe8] sm:$0xf]
  %v211 = vld [vmem:[%s3 + $0xec] sm:$0xf]
  %v212 = vld [vmem:[%s3 + $0xf0] sm:$0xf]
  %v213 = vld [vmem:[%s3 + $0xf4] sm:$0xf]
  %v214 = vld [vmem:[%s3 + $0xf8] sm:$0xf]
  %v215 = vld [vmem:[%s3 + $0xfc] sm:$0xf]
  %v216 = vld [vmem:[%s3 + $0x100] sm:$0xf]
  %v217 = vld [vmem:[%s3 + $0x104] sm:$0xf]
  %v218 = vld [vmem:[%s3 + $0x108] sm:$0xf]
  %v219 = vld [vmem:[%s3 + $0x10c] sm:$0xf]
  %v220 = vld [vmem:[%s3 + $0x110] sm:$0xf]
  %v221 = vld [vmem:[%s3 + $0x114] sm:$0xf]
  %v222 = vld [vmem:[%s3 + $0x118] sm:$0xf]
  %v223 = vld [vmem:[%s3 + $0x11c] sm:$0xf]
  %v224 = vld [vmem:[%s3 + $0x120] sm:$0xf]
  %v225 = vld [vmem:[%s3 + $0x124] sm:$0xf]
  %v226 = vld [vmem:[%s3 + $0x128] sm:$0xf]
  %v227 = vld [vmem:[%s3 + $0x12c] sm:$0xf]
  %v228 = vld [vmem:[%s3 + $0x130] sm:$0xf]
  %v229 = vld [vmem:[%s3 + $0x134] sm:$0xf]
  %v230 = vld [vmem:[%s3 + $0x138] sm:$0xf]
  %v231 = vld [vmem:[%s3 + $0x13c] sm:$0xf]
  %v232 = vld [vmem:[%s3 + $0x140] sm:$0xf]
  %v233 = vld [vmem:[%s3 + $0x144] sm:$0xf]
  %v234 = vld [vmem:[%s3 + $0x148] sm:$0xf]
  %v235 = vld [vmem:[%s3 + $0x14c] sm:$0xf]
  %v236 = vld [vmem:[%s3 + $0x150] sm:$0xf]
  %v237 = vld [vmem:[%s3 + $0x154] sm:$0xf]
  %v238 = vld [vmem:[%s3 + $0x158] sm:$0xf]
  %v239 = vld [vmem:[%s3 + $0x15c] sm:$0xf]
  %v240 = vld [vmem:[%s3 + $0x160] sm:$0xf]
  %v241 = vld [vmem:[%s3 + $0x164] sm:$0xf]
  %v242 = vld [vmem:[%s3 + $0x168] sm:$0xf]
  %v243 = vld [vmem:[%s3 + $0x16c] sm:$0xf]
  %v244 = vld [vmem:[%s3 + $0x170] sm:$0xf]
  %v245 = vld [vmem:[%s3 + $0x174] sm:$0xf]
  %v246 = vld [vmem:[%s3 + $0x178] sm:$0xf]
  %v247 = vld [vmem:[%s3 + $0x17c] sm:$0xf]
  %v248 = vld [vmem:[%s3 + $0x180] sm:$0xf]
  %v249 = vld [vmem:[%s3 + $0x184] sm:$0xf]
  %v250 = vld [vmem:[%s3 + $0x188] sm:$0xf]
  %v251 = vld [vmem:[%s3 + $0x18c] sm:$0xf]
  %v252 = vld [vmem:[%s3 + $0x190] sm:$0xf]
  %v253 = vld [vmem:[%s3 + $0x194] sm:$0xf]
  %v254 = vld [vmem:[%s3 + $0x198] sm:$0xf]
  %v255 = vld [vmem:[%s3 + $0x19c] sm:$0xf]
  %v256 = vld [vmem:[%s3 + $0x1a0] sm:$0xf]
  %v257 = vld [vmem:[%s3 + $0x1a4] sm:$0xf]
  %v258 = vld [vmem:[%s3 + $0x1a8] sm:$0xf]
  %v259 = vld [vmem:[%s3 + $0x1ac] sm:$0xf]
  %v260 = vld [vmem:[%s3 + $0x1b0] sm:$0xf]
  %v261 = vld [vmem:[%s3 + $0x1b4] sm:$0xf]
  %v262 = vld [vmem:[%s3 + $0x1b8] sm:$0xf]
  %v263 = vld [vmem:[%s3 + $0x1bc] sm:$0xf]
  %v264 = vld [vmem:[%s3 + $0x1c0] sm:$0xf]
  %v265 = vld [vmem:[%s3 + $0x1c4] sm:$0xf]
  %v266 = vld [vmem:[%s3 + $0x1c8] sm:$0xf]
  %v267 = vld [vmem:[%s3 + $0x1cc] sm:$0xf]
  %v268 = vld [vmem:[%s3 + $0x1d0] sm:$0xf]
  %v269 = vld [vmem:[%s3 + $0x1d4] sm:$0xf]
  %v270 = vld [vmem:[%s3 + $0x1d8] sm:$0xf]
  %v271 = vld [vmem:[%s3 + $0x1dc] sm:$0xf]
  %v272 = vld [vmem:[%s3 + $0x1e0] sm:$0xf]
  %v273 = vld [vmem:[%s3 + $0x1e4] sm:$0xf]
  %v274 = vld [vmem:[%s3 + $0x1e8] sm:$0xf]
  %v275 = vld [vmem:[%s3 + $0x1ec] sm:$0xf]
  %v276 = vld [vmem:[%s3 + $0x1f0] sm:$0xf]
  %v277 = vld [vmem:[%s3 + $0x1f4] sm:$0xf]
  %v278 = vld [vmem:[%s3 + $0x1f8] sm:$0xf]
  %v279 = vld [vmem:[%s3 + $0x1fc] sm:$0xf]
  %v280 = vld [vmem:[%s4] sm:$0x1]
  %v282 = vlaneseq
  %v283 = vshrl.u32 %v282, 7
  %v284 = vsub.s32 0, %v283
  %v285 = vrot.slane %v280, %v284
  %v415 = vunpack.c.l.b16 %v152
  %v416 = vunpack.c.l.b16 %v153
  %v417 = vunpack.c.l.b16 %v154
  %v418 = vunpack.c.l.b16 %v155
  %v419 = vunpack.c.l.b16 %v156
  %v420 = vunpack.c.l.b16 %v157
  %v421 = vunpack.c.l.b16 %v158
  %v422 = vunpack.c.l.b16 %v159
  %v423 = vunpack.c.l.b16 %v160
  %v424 = vunpack.c.l.b16 %v161
  %v425 = vunpack.c.l.b16 %v162
  %v426 = vunpack.c.l.b16 %v163
  %v427 = vunpack.c.l.b16 %v164
  %v428 = vunpack.c.l.b16 %v165
  %v429 = vunpack.c.l.b16 %v166
  %v430 = vunpack.c.l.b16 %v167
  %v431 = vunpack.c.l.b16 %v168
  %v432 = vunpack.c.l.b16 %v169
  %v433 = vunpack.c.l.b16 %v170
  %v434 = vunpack.c.l.b16 %v171
  %v435 = vunpack.c.l.b16 %v172
  %v436 = vunpack.c.l.b16 %v173
  %v437 = vunpack.c.l.b16 %v174
  %v438 = vunpack.c.l.b16 %v175
  %v439 = vunpack.c.l.b16 %v176
  %v440 = vunpack.c.l.b16 %v177
  %v441 = vunpack.c.l.b16 %v178
  %v442 = vunpack.c.l.b16 %v179
  %v443 = vunpack.c.l.b16 %v180
  %v444 = vunpack.c.l.b16 %v181
  %v445 = vunpack.c.l.b16 %v182
  %v446 = vunpack.c.l.b16 %v183
  %v447 = vunpack.c.l.b16 %v184
  %v448 = vunpack.c.l.b16 %v185
  %v449 = vunpack.c.l.b16 %v186
  %v450 = vunpack.c.l.b16 %v187
  %v451 = vunpack.c.l.b16 %v188
  %v452 = vunpack.c.l.b16 %v189
  %v453 = vunpack.c.l.b16 %v190
  %v454 = vunpack.c.l.b16 %v191
  %v455 = vunpack.c.l.b16 %v192
  %v456 = vunpack.c.l.b16 %v193
  %v457 = vunpack.c.l.b16 %v194
  %v458 = vunpack.c.l.b16 %v195
  %v459 = vunpack.c.l.b16 %v196
  %v460 = vunpack.c.l.b16 %v197
  %v461 = vunpack.c.l.b16 %v198
  %v462 = vunpack.c.l.b16 %v199
  %v463 = vunpack.c.l.b16 %v200
  %v464 = vunpack.c.l.b16 %v201
  %v465 = vunpack.c.l.b16 %v202
  %v466 = vunpack.c.l.b16 %v203
  %v467 = vunpack.c.l.b16 %v204
  %v468 = vunpack.c.l.b16 %v205
  %v469 = vunpack.c.l.b16 %v206
  %v470 = vunpack.c.l.b16 %v207
  %v471 = vunpack.c.l.b16 %v208
  %v472 = vunpack.c.l.b16 %v209
  %v473 = vunpack.c.l.b16 %v210
  %v474 = vunpack.c.l.b16 %v211
  %v475 = vunpack.c.l.b16 %v212
  %v476 = vunpack.c.l.b16 %v213
  %v477 = vunpack.c.l.b16 %v214
  %v478 = vunpack.c.l.b16 %v215
  %v479 = vunpack.c.l.b16 %v216
  %v480 = vunpack.c.l.b16 %v217
  %v481 = vunpack.c.l.b16 %v218
  %v482 = vunpack.c.l.b16 %v219
  %v483 = vunpack.c.l.b16 %v220
  %v484 = vunpack.c.l.b16 %v221
  %v485 = vunpack.c.l.b16 %v222
  %v486 = vunpack.c.l.b16 %v223
  %v487 = vunpack.c.l.b16 %v224
  %v488 = vunpack.c.l.b16 %v225
  %v489 = vunpack.c.l.b16 %v226
  %v490 = vunpack.c.l.b16 %v227
  %v491 = vunpack.c.l.b16 %v228
  %v492 = vunpack.c.l.b16 %v229
  %v493 = vunpack.c.l.b16 %v230
  %v494 = vunpack.c.l.b16 %v231
  %v495 = vunpack.c.l.b16 %v232
  %v496 = vunpack.c.l.b16 %v233
  %v497 = vunpack.c.l.b16 %v234
  %v498 = vunpack.c.l.b16 %v235
  %v499 = vunpack.c.l.b16 %v236
  %v500 = vunpack.c.l.b16 %v237
  %v501 = vunpack.c.l.b16 %v238
  %v502 = vunpack.c.l.b16 %v239
  %v503 = vunpack.c.l.b16 %v240
  %v504 = vunpack.c.l.b16 %v241
  %v505 = vunpack.c.l.b16 %v242
  %v506 = vunpack.c.l.b16 %v243
  %v507 = vunpack.c.l.b16 %v244
  %v508 = vunpack.c.l.b16 %v245
  %v509 = vunpack.c.l.b16 %v246
  %v510 = vunpack.c.l.b16 %v247
  %v511 = vunpack.c.l.b16 %v248
  %v512 = vunpack.c.l.b16 %v249
  %v513 = vunpack.c.l.b16 %v250
  %v514 = vunpack.c.l.b16 %v251
  %v515 = vunpack.c.l.b16 %v252
  %v516 = vunpack.c.l.b16 %v253
  %v517 = vunpack.c.l.b16 %v254
  %v518 = vunpack.c.l.b16 %v255
  %v519 = vunpack.c.l.b16 %v256
  %v520 = vunpack.c.l.b16 %v257
  %v521 = vunpack.c.l.b16 %v258
  %v522 = vunpack.c.l.b16 %v259
  %v523 = vunpack.c.l.b16 %v260
  %v524 = vunpack.c.l.b16 %v261
  %v525 = vunpack.c.l.b16 %v262
  %v526 = vunpack.c.l.b16 %v263
  %v527 = vunpack.c.l.b16 %v264
  %v528 = vunpack.c.l.b16 %v265
  %v529 = vunpack.c.l.b16 %v266
  %v530 = vunpack.c.l.b16 %v267
  %v531 = vunpack.c.l.b16 %v268
  %v532 = vunpack.c.l.b16 %v269
  %v533 = vunpack.c.l.b16 %v270
  %v534 = vunpack.c.l.b16 %v271
  %v535 = vunpack.c.l.b16 %v272
  %v536 = vunpack.c.l.b16 %v273
  %v537 = vunpack.c.l.b16 %v274
  %v538 = vunpack.c.l.b16 %v275
  %v539 = vunpack.c.l.b16 %v276
  %v540 = vunpack.c.l.b16 %v277
  %v541 = vunpack.c.l.b16 %v278
  %v542 = vunpack.c.l.b16 %v279
  %v543 = vpack.c.b16 %v416, %v415
  %v544 = vpack.c.b16 %v418, %v417
  %v545 = vpack.c.b16 %v420, %v419
  %v546 = vpack.c.b16 %v422, %v421
  %v547 = vpack.c.b16 %v424, %v423
  %v548 = vpack.c.b16 %v426, %v425
  %v549 = vpack.c.b16 %v428, %v427
  %v550 = vpack.c.b16 %v430, %v429
  %v551 = vpack.c.b16 %v432, %v431
  %v552 = vpack.c.b16 %v434, %v433
  %v553 = vpack.c.b16 %v436, %v435
  %v554 = vpack.c.b16 %v438, %v437
  %v555 = vpack.c.b16 %v440, %v439
  %v556 = vpack.c.b16 %v442, %v441
  %v557 = vpack.c.b16 %v444, %v443
  %v558 = vpack.c.b16 %v446, %v445
  %v559 = vpack.c.b16 %v448, %v447
  %v560 = vpack.c.b16 %v450, %v449
  %v561 = vpack.c.b16 %v452, %v451
  %v562 = vpack.c.b16 %v454, %v453
  %v563 = vpack.c.b16 %v456, %v455
  %v564 = vpack.c.b16 %v458, %v457
  %v565 = vpack.c.b16 %v460, %v459
  %v566 = vpack.c.b16 %v462, %v461
  %v567 = vpack.c.b16 %v464, %v463
  %v568 = vpack.c.b16 %v466, %v465
  %v569 = vpack.c.b16 %v468, %v467
  %v570 = vpack.c.b16 %v470, %v469
  %v571 = vpack.c.b16 %v472, %v471
  %v572 = vpack.c.b16 %v474, %v473
  %v573 = vpack.c.b16 %v476, %v475
  %v574 = vpack.c.b16 %v478, %v477
  %v575 = vpack.c.b16 %v480, %v479
  %v576 = vpack.c.b16 %v482, %v481
  %v577 = vpack.c.b16 %v484, %v483
  %v578 = vpack.c.b16 %v486, %v485
  %v579 = vpack.c.b16 %v488, %v487
  %v580 = vpack.c.b16 %v490, %v489
  %v581 = vpack.c.b16 %v492, %v491
  %v582 = vpack.c.b16 %v494, %v493
  %v583 = vpack.c.b16 %v496, %v495
  %v584 = vpack.c.b16 %v498, %v497
  %v585 = vpack.c.b16 %v500, %v499
  %v586 = vpack.c.b16 %v502, %v501
  %v587 = vpack.c.b16 %v504, %v503
  %v588 = vpack.c.b16 %v506, %v505
  %v589 = vpack.c.b16 %v508, %v507
  %v590 = vpack.c.b16 %v510, %v509
  %v591 = vpack.c.b16 %v512, %v511
  %v592 = vpack.c.b16 %v514, %v513
  %v593 = vpack.c.b16 %v516, %v515
  %v594 = vpack.c.b16 %v518, %v517
  %v595 = vpack.c.b16 %v520, %v519
  %v596 = vpack.c.b16 %v522, %v521
  %v597 = vpack.c.b16 %v524, %v523
  %v598 = vpack.c.b16 %v526, %v525
  %v599 = vpack.c.b16 %v528, %v527
  %v600 = vpack.c.b16 %v530, %v529
  %v601 = vpack.c.b16 %v532, %v531
  %v602 = vpack.c.b16 %v534, %v533
  %v603 = vpack.c.b16 %v536, %v535
  %v604 = vpack.c.b16 %v538, %v537
  %v605 = vpack.c.b16 %v540, %v539
  %v606 = vpack.c.b16 %v542, %v541
  %671 = vmatprep.subr.bf16.mxu0 0
  %672 = vmatpush1.bf16.msra.mxu0 %v543
  %673 = vmatprep.subr.bf16.mxu0 0
  %674 = vmatpush1.bf16.msra.mxu0 %v544
  %675 = vmatprep.subr.bf16.mxu0 0
  %676 = vmatpush1.bf16.msra.mxu0 %v545
  %677 = vmatprep.subr.bf16.mxu0 0
  %678 = vmatpush1.bf16.msra.mxu0 %v546
  %679 = vmatprep.subr.bf16.mxu0 0
  %680 = vmatpush1.bf16.msra.mxu0 %v547
  %681 = vmatprep.subr.bf16.mxu0 0
  %682 = vmatpush1.bf16.msra.mxu0 %v548
  %683 = vmatprep.subr.bf16.mxu0 0
  %684 = vmatpush1.bf16.msra.mxu0 %v549
  %685 = vmatprep.subr.bf16.mxu0 0
  %686 = vmatpush1.bf16.msra.mxu0 %v550
  %687 = vmatprep.subr.bf16.mxu0 0
  %688 = vmatpush1.bf16.msra.mxu0 %v551
  %689 = vmatprep.subr.bf16.mxu0 0
  %690 = vmatpush1.bf16.msra.mxu0 %v552
  %691 = vmatprep.subr.bf16.mxu0 0
  %692 = vmatpush1.bf16.msra.mxu0 %v553
  %693 = vmatprep.subr.bf16.mxu0 0
  %694 = vmatpush1.bf16.msra.mxu0 %v554
  %695 = vmatprep.subr.bf16.mxu0 0
  %696 = vmatpush1.bf16.msra.mxu0 %v555
  %697 = vmatprep.subr.bf16.mxu0 0
  %698 = vmatpush1.bf16.msra.mxu0 %v556
  %699 = vmatprep.subr.bf16.mxu0 0
  %700 = vmatpush1.bf16.msra.mxu0 %v557
  %701 = vmatprep.subr.bf16.mxu0 0
  %702 = vmatpush1.bf16.msra.mxu0 %v558
  %703 = vmatprep.mubr.bf16.mxu0 %v145
  %704 = vmatmul.mubr.bf16.gmra.mrb[0].mxu0 %v144
  %v705 = vpop.f32.mrb[0].mxu0
  %v706 = vadd.f32 %v285, %v705
  %v707 = vpop.f32.mrb[0].mxu0
  %v708 = vpop.f32.mrb[0].mxu0
  %v709 = vpop.f32.mrb[0].mxu0
  %710 = vdwg.mxu0
  %711 = vmatprep.subr.bf16.mxu0 0
  %712 = vmatpush1.bf16.msra.mxu0 %v559
  %713 = vmatprep.subr.bf16.mxu0 0
  %714 = vmatpush1.bf16.msra.mxu0 %v560
  %715 = vmatprep.subr.bf16.mxu0 0
  %716 = vmatpush1.bf16.msra.mxu0 %v561
  %717 = vmatprep.subr.bf16.mxu0 0
  %718 = vmatpush1.bf16.msra.mxu0 %v562
  %719 = vmatprep.subr.bf16.mxu0 0
  %720 = vmatpush1.bf16.msra.mxu0 %v563
  %721 = vmatprep.subr.bf16.mxu0 0
  %722 = vmatpush1.bf16.msra.mxu0 %v564
  %723 = vmatprep.subr.bf16.mxu0 0
  %724 = vmatpush1.bf16.msra.mxu0 %v565
  %725 = vmatprep.subr.bf16.mxu0 0
  %726 = vmatpush1.bf16.msra.mxu0 %v566
  %727 = vmatprep.subr.bf16.mxu0 0
  %728 = vmatpush1.bf16.msra.mxu0 %v567
  %729 = vmatprep.subr.bf16.mxu0 0
  %730 = vmatpush1.bf16.msra.mxu0 %v568
  %731 = vmatprep.subr.bf16.mxu0 0
  %732 = vmatpush1.bf16.msra.mxu0 %v569
  %733 = vmatprep.subr.bf16.mxu0 0
  %734 = vmatpush1.bf16.msra.mxu0 %v570
  %735 = vmatprep.subr.bf16.mxu0 0
  %736 = vmatpush1.bf16.msra.mxu0 %v571
  %737 = vmatprep.subr.bf16.mxu0 0
  %738 = vmatpush1.bf16.msra.mxu0 %v572
  %739 = vmatprep.subr.bf16.mxu0 0
  %740 = vmatpush1.bf16.msra.mxu0 %v573
  %741 = vmatprep.subr.bf16.mxu0 0
  %742 = vmatpush1.bf16.msra.mxu0 %v574
  %743 = vmatprep.mubr.bf16.mxu0 %v147
  %744 = vmatmul.mubr.bf16.gmra.mrb[0].mxu0 %v146
  %v745 = vpop.f32.mrb[0].mxu0
  %v746 = vadd.f32 %v706, %v745
  %v747 = vpop.f32.mrb[0].mxu0
  %v748 = vpop.f32.mrb[0].mxu0
  %v749 = vpop.f32.mrb[0].mxu0
  %750 = vdwg.mxu0
  %751 = vmatprep.subr.bf16.mxu0 0
  %752 = vmatpush1.bf16.msra.mxu0 %v575
  %753 = vmatprep.subr.bf16.mxu0 0
  %754 = vmatpush1.bf16.msra.mxu0 %v576
  %755 = vmatprep.subr.bf16.mxu0 0
  %756 = vmatpush1.bf16.msra.mxu0 %v577
  %757 = vmatprep.subr.bf16.mxu0 0
  %758 = vmatpush1.bf16.msra.mxu0 %v578
  %759 = vmatprep.subr.bf16.mxu0 0
  %760 = vmatpush1.bf16.msra.mxu0 %v579
  %761 = vmatprep.subr.bf16.mxu0 0
  %762 = vmatpush1.bf16.msra.mxu0 %v580
  %763 = vmatprep.subr.bf16.mxu0 0
  %764 = vmatpush1.bf16.msra.mxu0 %v581
  %765 = vmatprep.subr.bf16.mxu0 0
  %766 = vmatpush1.bf16.msra.mxu0 %v582
  %767 = vmatprep.subr.bf16.mxu0 0
  %768 = vmatpush1.bf16.msra.mxu0 %v583
  %769 = vmatprep.subr.bf16.mxu0 0
  %770 = vmatpush1.bf16.msra.mxu0 %v584
  %771 = vmatprep.subr.bf16.mxu0 0
  %772 = vmatpush1.bf16.msra.mxu0 %v585
  %773 = vmatprep.subr.bf16.mxu0 0
  %774 = vmatpush1.bf16.msra.mxu0 %v586
  %775 = vmatprep.subr.bf16.mxu0 0
  %776 = vmatpush1.bf16.msra.mxu0 %v587
  %777 = vmatprep.subr.bf16.mxu0 0
  %778 = vmatpush1.bf16.msra.mxu0 %v588
  %779 = vmatprep.subr.bf16.mxu0 0
  %780 = vmatpush1.bf16.msra.mxu0 %v589
  %781 = vmatprep.subr.bf16.mxu0 0
  %782 = vmatpush1.bf16.msra.mxu0 %v590
  %783 = vmatprep.mubr.bf16.mxu0 %v149
  %784 = vmatmul.mubr.bf16.gmra.mrb[0].mxu0 %v148
  %v785 = vpop.f32.mrb[0].mxu0
  %v786 = vadd.f32 %v746, %v785
  %v787 = vpop.f32.mrb[0].mxu0
  %v788 = vpop.f32.mrb[0].mxu0
  %v789 = vpop.f32.mrb[0].mxu0
  %790 = vdwg.mxu0
  %791 = vmatprep.subr.bf16.mxu0 0
  %792 = vmatpush1.bf16.msra.mxu0 %v591
  %793 = vmatprep.subr.bf16.mxu0 0
  %794 = vmatpush1.bf16.msra.mxu0 %v592
  %795 = vmatprep.subr.bf16.mxu0 0
  %796 = vmatpush1.bf16.msra.mxu0 %v593
  %797 = vmatprep.subr.bf16.mxu0 0
  %798 = vmatpush1.bf16.msra.mxu0 %v594
  %799 = vmatprep.subr.bf16.mxu0 0
  %800 = vmatpush1.bf16.msra.mxu0 %v595
  %801 = vmatprep.subr.bf16.mxu0 0
  %802 = vmatpush1.bf16.msra.mxu0 %v596
  %803 = vmatprep.subr.bf16.mxu0 0
  %804 = vmatpush1.bf16.msra.mxu0 %v597
  %805 = vmatprep.subr.bf16.mxu0 0
  %806 = vmatpush1.bf16.msra.mxu0 %v598
  %807 = vmatprep.subr.bf16.mxu0 0
  %808 = vmatpush1.bf16.msra.mxu0 %v599
  %809 = vmatprep.subr.bf16.mxu0 0
  %810 = vmatpush1.bf16.msra.mxu0 %v600
  %811 = vmatprep.subr.bf16.mxu0 0
  %812 = vmatpush1.bf16.msra.mxu0 %v601
  %813 = vmatprep.subr.bf16.mxu0 0
  %814 = vmatpush1.bf16.msra.mxu0 %v602
  %815 = vmatprep.subr.bf16.mxu0 0
  %816 = vmatpush1.bf16.msra.mxu0 %v603
  %817 = vmatprep.subr.bf16.mxu0 0
  %818 = vmatpush1.bf16.msra.mxu0 %v604
  %819 = vmatprep.subr.bf16.mxu0 0
  %820 = vmatpush1.bf16.msra.mxu0 %v605
  %821 = vmatprep.subr.bf16.mxu0 0
  %822 = vmatpush1.bf16.msra.mxu0 %v606
  %823 = vmatprep.mubr.bf16.mxu0 %v151
  %824 = vmatmul.mubr.bf16.gmra.mrb[0].mxu0 %v150
  %v825 = vpop.f32.mrb[0].mxu0
  %v826 = vadd.f32 %v786, %v825
  %v827 = vpop.f32.mrb[0].mxu0
  %v828 = vpop.f32.mrb[0].mxu0
  %v829 = vpop.f32.mrb[0].mxu0
  %830 = vdwg.mxu0
  %v831 = vmax.f32 %v826, 0.0
  %v832 = vld [vmem:[%s5] sm:$0xff]
  %v833 = vld [vmem:[%s5 + $0x8] sm:$0xff]
  %v834 = vld [vmem:[%s5 + $0x10] sm:$0xff]
  %v835 = vld [vmem:[%s5 + $0x18] sm:$0xff]
  %v836 = vld [vmem:[%s5 + $0x20] sm:$0xff]
  %v837 = vld [vmem:[%s5 + $0x28] sm:$0xff]
  %v838 = vld [vmem:[%s5 + $0x30] sm:$0xff]
  %v839 = vld [vmem:[%s5 + $0x38] sm:$0xff]
  %840 = vxpose.xlu0.b32.start [1/16] %v832, 128
  %841 = vxpose.xlu0.b32.cont [2/16] %v833, 128
  %842 = vxpose.xlu0.b32.cont [3/16] %v834, 128
  %843 = vxpose.xlu0.b32.cont [4/16] %v835, 128
  %844 = vxpose.xlu0.b32.cont [5/16] %v836, 128
  %845 = vxpose.xlu0.b32.cont [6/16] %v837, 128
  %846 = vxpose.xlu0.b32.cont [7/16] %v838, 128
  %847 = vxpose.xlu0.b32.cont [8/16] %v839, 128
  %848 = vxpose.xlu0.b32.cont [9/16] 0.0, 128
  %849 = vxpose.xlu0.b32.cont [10/16] 0.0, 128
  %850 = vxpose.xlu0.b32.cont [11/16] 0.0, 128
  %851 = vxpose.xlu0.b32.cont [12/16] 0.0, 128
  %852 = vxpose.xlu0.b32.cont [13/16] 0.0, 128
  %853 = vxpose.xlu0.b32.cont [14/16] 0.0, 128
  %854 = vxpose.xlu0.b32.cont [15/16] 0.0, 128
  %855 = vxpose.xlu0.b32.end [16/16] 0.0, 128
  %v856 = vpop.trf.xlu0
  %v857 = vpop.trf.xlu0
  %v858 = vpop.trf.xlu0
  %v859 = vpop.trf.xlu0
  %v860 = vpop.trf.xlu0
  %v861 = vpop.trf.xlu0
  %v862 = vpop.trf.xlu0
  %v863 = vpop.trf.xlu0
  %v864 = vpop.trf.xlu0
  %v865 = vpop.trf.xlu0
  %v866 = vpop.trf.xlu0
  %v867 = vpop.trf.xlu0
  %v868 = vpop.trf.xlu0
  %v869 = vpop.trf.xlu0
  %v870 = vpop.trf.xlu0
  %v871 = vpop.trf.xlu0
  %vm872 = vcmask 523264
  %v874 = vsel %vm872, %v856, 0
  %v877 = vsel %vm872, %v831, 0
  %879 = vmatprep.subr.mxu0 0.0
  %880 = vmatpush1.xpose.msra.mxu0 %v877
  %881 = vmatprep.subr.mxu0 0.0
  %882 = vmatpush1.xpose.msra.mxu0 0.0
  %883 = vmatprep.subr.mxu0 0.0
  %884 = vmatpush1.xpose.msra.mxu0 0.0
  %885 = vmatprep.subr.mxu0 0.0
  %886 = vmatpush1.xpose.msra.mxu0 0.0
  %887 = vmatprep.subr.mxu0 0.0
  %888 = vmatpush1.xpose.msra.mxu0 0.0
  %889 = vmatprep.subr.mxu0 0.0
  %890 = vmatpush1.xpose.msra.mxu0 0.0
  %891 = vmatprep.subr.mxu0 0.0
  %892 = vmatpush1.xpose.msra.mxu0 0.0
  %893 = vmatprep.subr.mxu0 0.0
  %894 = vmatpush1.xpose.msra.mxu0 0.0
  %895 = vmatprep.subr.mxu0 0.0
  %896 = vmatpush1.xpose.msra.mxu0 0.0
  %897 = vmatprep.subr.mxu0 0.0
  %898 = vmatpush1.xpose.msra.mxu0 0.0
  %899 = vmatprep.subr.mxu0 0.0
  %900 = vmatpush1.xpose.msra.mxu0 0.0
  %901 = vmatprep.subr.mxu0 0.0
  %902 = vmatpush1.xpose.msra.mxu0 0.0
  %903 = vmatprep.subr.mxu0 0.0
  %904 = vmatpush1.xpose.msra.mxu0 0.0
  %905 = vmatprep.subr.mxu0 0.0
  %906 = vmatpush1.xpose.msra.mxu0 0.0
  %907 = vmatprep.subr.mxu0 0.0
  %908 = vmatpush1.xpose.msra.mxu0 0.0
  %909 = vmatprep.subr.mxu0 0.0
  %910 = vmatpush1.xpose.msra.mxu0 0.0
  %911 = vmatprep.subr.mxu0 0.0
  %912 = vmatpush1.xpose.msra.mxu0 0.0
  %913 = vmatprep.subr.mxu0 0.0
  %914 = vmatpush1.xpose.msra.mxu0 0.0
  %915 = vmatprep.subr.mxu0 0.0
  %916 = vmatpush1.xpose.msra.mxu0 0.0
  %917 = vmatprep.subr.mxu0 0.0
  %918 = vmatpush1.xpose.msra.mxu0 0.0
  %919 = vmatprep.subr.mxu0 0.0
  %920 = vmatpush1.xpose.msra.mxu0 0.0
  %921 = vmatprep.subr.mxu0 0.0
  %922 = vmatpush1.xpose.msra.mxu0 0.0
  %923 = vmatprep.subr.mxu0 0.0
  %924 = vmatpush1.xpose.msra.mxu0 0.0
  %925 = vmatprep.subr.mxu0 0.0
  %926 = vmatpush1.xpose.msra.mxu0 0.0
  %927 = vmatprep.subr.mxu0 0.0
  %928 = vmatpush1.xpose.msra.mxu0 0.0
  %929 = vmatprep.subr.mxu0 0.0
  %930 = vmatpush1.xpose.msra.mxu0 0.0
  %931 = vmatprep.subr.mxu0 0.0
  %932 = vmatpush1.xpose.msra.mxu0 0.0
  %933 = vmatprep.subr.mxu0 0.0
  %934 = vmatpush1.xpose.msra.mxu0 0.0
  %935 = vmatprep.subr.mxu0 0.0
  %936 = vmatpush1.xpose.msra.mxu0 0.0
  %937 = vmatprep.subr.mxu0 0.0
  %938 = vmatpush1.xpose.msra.mxu0 0.0
  %939 = vmatprep.subr.mxu0 0.0
  %940 = vmatpush1.xpose.msra.mxu0 0.0
  %941 = vmatprep.subr.mxu0 0.0
  %942 = vmatpush1.xpose.msra.mxu0 0.0
  %943 = vmatprep.mubr.f32.mxu0 0.0
  %944 = vmatmul.mubr.f32.gmra.mrb[0].mxu0 %v874
  %v945 = vpop.f32.mrb[0].mxu0
  %v946 = vadd.f32 0.0, %v945
  %v947 = vpop.f32.mrb[0].mxu0
  %948 = vdwg.mxu0
  %vm949 = vcmask 64512
  %950 = vst.msk [vmem:[%s6] sm:$0xff] %vm949, %v946
  // Predicated region
  $region26: #{_net_forward.2} parent=0 // pred_check
    _
  $region27: #{_net_forward.2} parent=0 // pred_check_branch
    %952 = sbr.rel (0) target = $region29
  $region28: #{_net_forward.2} parent=0 // pred_region
    _
  $region29: #{_net_forward.2} parent=0 // pred_fallthru
    _
  // Predicated region
  $region30: #{_net_forward.2} parent=0 // pred_check
    _
  $region31: #{_net_forward.2} parent=0 // pred_check_branch
    %954 = sbr.rel (0) target = $region33
  $region32: #{_net_forward.2} parent=0 // pred_region
    _
  $region33: #{_net_forward.2} parent=0 // pred_fallthru
    _

// kernel: _net_forward.3
$region0: #{_net_forward.3}
  #allocation0 [shape = 'u32[]', space=smem, size = 0x4, offset = 0x4, fixed_abs, tag = 'smem constant byte address 0x4 - core index']
  #allocation1 [shape = 'u32[144,128]{1,0:T(1,128)}', space=vmem, size = 0x12000, scoped, tag = 'internal scratch']
  #allocation9 [shape = 's32[]', space=sflag, size = 0x4, offset = 0, fixed_abs, tag = 'sflag constant byte address 0x0 - dummy sync flag']
  %s0 = inlined_call_operand.vmem [shape: f32[2,16,2], index: 0, kind: input, shape index: {}]
  %s1 = inlined_call_operand.vmem [shape: f32[2,3,64,64], index: 1, kind: input, shape index: {}]
  %s2 = inlined_call_operand.vmem [shape: f32[64,2], index: 2, kind: input, shape index: {}]
  %s3 = inlined_call_operand.vmem [shape: f32[2,64], index: 3, kind: input, shape index: {}]
  %s4 = inlined_call_operand.vmem [shape: f32[3,8], index: 4, kind: input, shape index: {}]
  %s5 = inlined_call_operand.vmem [shape: f32[1,8], index: 5, kind: input, shape index: {}]
  %s6 = inlined_call_operand.hbm [shape: f32[2,8,64,64], index: 6, kind: output, shape index: {}]
  %s7 = sld [smem:[#allocation0]]
  $region103: #{_net_forward.3} parent=0
    _
  %s9 = ssub.s32 1, %s7
  %s10 = scalar_select 0, %s9, %s7
  $region1: #{_net_forward.3} parent=0
    #allocation2 [shape = 'u8[98304]{0}', space=vmem, size = 0x18000, scoped, tag = 'input window, operand 1']
    #allocation3 [shape = 'u8[2048]{0}', space=smem, size = 0x800, scoped, tag = 'input window, operand 4, single buffered']
    #allocation4 [shape = 's32[2]{0}', space=sflag, size = 0x8, scoped, tag = 'scoped memory for _net_forward.3']
    #allocation5 [shape = 's32[2]{0}', space=sflag, size = 0x8, scoped, tag = 'scoped memory for _net_forward.3']
    #allocation6 [shape = 'u8[512]{0}', space=smem, size = 0x200, scoped, tag = 'input window, operand 5, single buffered']
    #allocation7 [shape = 's32[1]{0}', space=sflag, size = 0x4, scoped, tag = 'scoped memory for _net_forward.3']
    #allocation8 [shape = 'u8[262144]{0}', space=vmem, size = 0x40000, scoped, tag = 'output window, operand 0']
    %11 = vsyncpa [#allocation5], 0
    %12 = vsyncpa [#allocation7], 0
    %13 = vsyncpa [#allocation4], 0
    %s14 = scalar_lea.sflag [#allocation4], 1
    %15 = vsyncpa %s14, 0
    loop: start=0, step=1, limit=6
    $region2: #{_net_forward.3} parent=1 // loop_pre_header
      _
    $region3: #{_net_forward.3} parent=1 // loop_header
      %s17 = sphi 0, %s21
      %p18 = scmp.ge.s32.totalorder %s17, 6
      %s24 = sphi 0, %s36
      %s25 = sphi 0, %s32
      %s26 = sphi 0, %s24
      %s27 = sphi 0, %s25
      %s28 = sphi 0, %s26
      %s29 = sphi 0, %s27
      %s39 = sphi 0, %s41
      %s42 = sphi 0, %s39
      %s43 = sphi 0, %s42
      %s59 = sphi 0, %s43
      %s67 = sphi 0, %s69
      %s70 = sphi 0, %s67
      %s71 = sphi 0, %s70
      %s87 = sphi 0, %s71
      %s93 = sphi 0, %s95
      %s96 = sphi 0, %s93
      %s97 = sphi 0, %s96
      %s113 = sphi 0, %s97
      %s117 = sphi 0, %s117
      %s119 = sphi 0, %s117
      %s120 = sphi 0, %s119
      %s134 = sphi 0, %s120
      %s138 = sphi 0, %s138
      %s140 = sphi 0, %s138
      %s141 = sphi 0, %s140
      %s155 = sphi 0, %s141
      %s159 = sphi 0, %s159
      %s161 = sphi 0, %s159
      %s162 = sphi 0, %s161
      %s176 = sphi 0, %s162
      %s184 = sphi 0, %s186
      %s187 = sphi 0, %s184
      %s188 = sphi 0, %s187
      %s204 = sphi 0, %s188
    $region4: #{_net_forward.3} parent=1 // loop_header_branch
      %20 = sbr.rel (%p18) target = $region8
    $region5: #{_net_forward.3} parent=1 // loop_body
      %s22 = ssub.s32 %s17, 1
      %s23 = ssub.s32 %s17, 2
      %s30 = sadd.s32 1, %s25
      %p31 = scmp.ge.s32.totalorder %s30, 2
      %s32 = scalar_select %p31, 0, %s30
      %s33 = sadd.s32 1, %s24
      %s34 = scalar_select %p31, %s33, %s24
      %p35 = scmp.ge.s32.totalorder %s34, 2
      %s36 = scalar_select %p35, 0, %s34
      %s37 = ssub.s32 %s24, %s36
      %p38 = scmp.eq.s32.totalorder %s37, 0
      %s40 = sadd.s32 %s39, 1
      %s41 = scalar_select %p38, %s39, %s40
      %p44 = pneg %p38
      %p45 = scmp.eq.s32.totalorder %s17, 3
      %p46 = por %p44, %p45
      %p47 = scmp.ne.s32.totalorder %s39, %s42
      %p48 = scmp.eq.s32.totalorder %s17, 0
      %p49 = por %p47, %p48
      %p50 = scmp.ne.s32.totalorder %s39, %s42
      %p51 = scmp.eq.s32.totalorder %s22, 3
      %p52 = por %p50, %p51
      %p53 = scmp.ne.s32.totalorder %s42, %s43
      %p54 = scmp.eq.s32.totalorder %s22, 0
      %p55 = por %p53, %p54
      %p56 = scmp.ne.s32.totalorder %s42, %s43
      %p57 = scmp.eq.s32.totalorder %s23, 3
      %p58 = por %p56, %p57
      %p60 = scmp.ne.s32.totalorder %s43, %s59
      %p61 = scmp.eq.s32.totalorder %s23, 0
      %p62 = por %p60, %p61
      %s63 = ssub.s32 %s24, %s36
      %s64 = ssub.s32 %s25, %s32
      %s65 = sor.u32 %s63, %s64
      %p66 = scmp.eq.s32.totalorder %s65, 0
      %s68 = sadd.s32 %s67, 1
      %s69 = scalar_select %p66, %s67, %s68
      %p72 = pneg %p66
      %p73 = scmp.eq.s32.totalorder %s17, 3
      %p74 = por %p72, %p73
      %p75 = scmp.ne.s32.totalorder %s67, %s70
      %p76 = scmp.eq.s32.totalorder %s17, 0
      %p77 = por %p75, %p76
      %p78 = scmp.ne.s32.totalorder %s67, %s70
      %p79 = scmp.eq.s32.totalorder %s22, 3
      %p80 = por %p78, %p79
      %p81 = scmp.ne.s32.totalorder %s70, %s71
      %p82 = scmp.eq.s32.totalorder %s22, 0
      %p83 = por %p81, %p82
      %p84 = scmp.ne.s32.totalorder %s70, %s71
      %p85 = scmp.eq.s32.totalorder %s23, 3
      %p86 = por %p84, %p85
      %p88 = scmp.ne.s32.totalorder %s71, %s87
      %p89 = scmp.eq.s32.totalorder %s23, 0
      %p90 = por %p88, %p89
      %s91 = ssub.s32 %s25, %s32
      %p92 = scmp.eq.s32.totalorder %s91, 0
      %s94 = sadd.s32 %s93, 1
      %s95 = scalar_select %p92, %s93, %s94
      %p98 = pneg %p92
      %p99 = scmp.eq.s32.totalorder %s17, 3
      %p100 = por %p98, %p99
      %p101 = scmp.ne.s32.totalorder %s93, %s96
      %p102 = scmp.eq.s32.totalorder %s17, 0
      %p103 = por %p101, %p102
      %p104 = scmp.ne.s32.totalorder %s93, %s96
      %p105 = scmp.eq.s32.totalorder %s22, 3
      %p106 = por %p104, %p105
      %p107 = scmp.ne.s32.totalorder %s96, %s97
      %p108 = scmp.eq.s32.totalorder %s22, 0
      %p109 = por %p107, %p108
      %p110 = scmp.ne.s32.totalorder %s96, %s97
      %p111 = scmp.eq.s32.totalorder %s23, 3
      %p112 = por %p110, %p111
      %p114 = scmp.ne.s32.totalorder %s97, %s113
      %p115 = scmp.eq.s32.totalorder %s23, 0
      %p116 = por %p114, %p115
      %s118 = sadd.s32 %s117, 1
      %p121 = scmp.eq.s32.totalorder %s17, 3
      %p122 = scmp.ne.s32.totalorder %s117, %s119
      %p123 = scmp.eq.s32.totalorder %s17, 0
      %p124 = por %p122, %p123
      %p125 = scmp.ne.s32.totalorder %s117, %s119
      %p126 = scmp.eq.s32.totalorder %s22, 3
      %p127 = por %p125, %p126
      %p128 = scmp.ne.s32.totalorder %s119, %s120
      %p129 = scmp.eq.s32.totalorder %s22, 0
      %p130 = por %p128, %p129
      %p131 = scmp.ne.s32.totalorder %s119, %s120
      %p132 = scmp.eq.s32.totalorder %s23, 3
      %p133 = por %p131, %p132
      %p135 = scmp.ne.s32.totalorder %s120, %s134
      %p136 = scmp.eq.s32.totalorder %s23, 0
      %p137 = por %p135, %p136
      %s139 = sadd.s32 %s138, 1
      %p142 = scmp.eq.s32.totalorder %s17, 3
      %p143 = scmp.ne.s32.totalorder %s138, %s140
      %p144 = scmp.eq.s32.totalorder %s17, 0
      %p145 = por %p143, %p144
      %p146 = scmp.ne.s32.totalorder %s138, %s140
      %p147 = scmp.eq.s32.totalorder %s22, 3
      %p148 = por %p146, %p147
      %p149 = scmp.ne.s32.totalorder %s140, %s141
      %p150 = scmp.eq.s32.totalorder %s22, 0
      %p151 = por %p149, %p150
      %p152 = scmp.ne.s32.totalorder %s140, %s141
      %p153 = scmp.eq.s32.totalorder %s23, 3
      %p154 = por %p152, %p153
      %p156 = scmp.ne.s32.totalorder %s141, %s155
      %p157 = scmp.eq.s32.totalorder %s23, 0
      %p158 = por %p156, %p157
      %s160 = sadd.s32 %s159, 1
      %p163 = scmp.eq.s32.totalorder %s17, 3
      %p164 = scmp.ne.s32.totalorder %s159, %s161
      %p165 = scmp.eq.s32.totalorder %s17, 0
      %p166 = por %p164, %p165
      %p167 = scmp.ne.s32.totalorder %s159, %s161
      %p168 = scmp.eq.s32.totalorder %s22, 3
      %p169 = por %p167, %p168
      %p170 = scmp.ne.s32.totalorder %s161, %s162
      %p171 = scmp.eq.s32.totalorder %s22, 0
      %p172 = por %p170, %p171
      %p173 = scmp.ne.s32.totalorder %s161, %s162
      %p174 = scmp.eq.s32.totalorder %s23, 3
      %p175 = por %p173, %p174
      %p177 = scmp.ne.s32.totalorder %s162, %s176
      %p178 = scmp.eq.s32.totalorder %s23, 0
      %p179 = por %p177, %p178
      %s180 = ssub.s32 %s24, %s36
      %s181 = ssub.s32 %s25, %s32
      %s182 = sor.u32 %s180, %s181
      %p183 = scmp.eq.s32.totalorder %s182, 0
      %s185 = sadd.s32 %s184, 1
      %s186 = scalar_select %p183, %s184, %s185
      %p189 = pneg %p183
      %p190 = scmp.eq.s32.totalorder %s17, 3
      %p191 = por %p189, %p190
      %p192 = scmp.ne.s32.totalorder %s184, %s187
      %p193 = scmp.eq.s32.totalorder %s17, 0
      %p194 = por %p192, %p193
      %p195 = scmp.ne.s32.totalorder %s184, %s187
      %p196 = scmp.eq.s32.totalorder %s22, 3
      %p197 = por %p195, %p196
      %p198 = scmp.ne.s32.totalorder %s187, %s188
      %p199 = scmp.eq.s32.totalorder %s22, 0
      %p200 = por %p198, %p199
      %p201 = scmp.ne.s32.totalorder %s187, %s188
      %p202 = scmp.eq.s32.totalorder %s23, 3
      %p203 = por %p201, %p202
      %p205 = scmp.ne.s32.totalorder %s188, %s204
      %p206 = scmp.eq.s32.totalorder %s23, 0
      %p207 = por %p205, %p206
      %p208 = scmp.le.s32.totalorder 1, %s17
      %p209 = scmp.lt.s32.totalorder %s17, 5
      %p210 = pnand %p208, %p209
      %p211 = pneg %p210
      // Predicated region
      $region9: #{_net_forward.3} parent=5 // pred_check
        _
      $region10: #{_net_forward.3} parent=5 // pred_check_branch
        %213 = sbr.rel (%p210) target = $region12
      $region11: #{_net_forward.3} parent=5 // pred_region
        %s214 = ssub.s32 %s17, 1
        // Predicated region
        $region13: #{_net_forward.3} parent=11 // pred_check
          %p215 = pneg %p130
        $region14: #{_net_forward.3} parent=11 // pred_check_branch
          %217 = sbr.rel (%p215) target = $region16
        $region15: #{_net_forward.3} parent=11 // pred_region
          _
        $region16: #{_net_forward.3} parent=11 // pred_fallthru
          _
        // Predicated region
        $region17: #{_net_forward.3} parent=11 // pred_check
          %p218 = pneg %p151
        $region18: #{_net_forward.3} parent=11 // pred_check_branch
          %220 = sbr.rel (%p218) target = $region20
        $region19: #{_net_forward.3} parent=11 // pred_region
          %s222 = ssub.s32 64, 64
          %223 = vsyncadd [#allocation5], %s222
          %s225 = sshll.u32 %s4, 4
          %s226 = int_to_ptr.vmem [resolvable:$true] %s225
          %228 = dma.vmem_to_smem %s226, 64, [#allocation3], [#allocation5]
        $region20: #{_net_forward.3} parent=11 // pred_fallthru
          _
        // Predicated region
        $region21: #{_net_forward.3} parent=11 // pred_check
          %p229 = pneg %p172
        $region22: #{_net_forward.3} parent=11 // pred_check_branch
          %231 = sbr.rel (%p229) target = $region24
        $region23: #{_net_forward.3} parent=11 // pred_region
          %s233 = ssub.s32 16, 16
          %234 = vsyncadd [#allocation7], %s233
          %s236 = sshll.u32 %s5, 4
          %s237 = int_to_ptr.vmem [resolvable:$true] %s236
          %239 = dma.vmem_to_smem %s237, 16, [#allocation6], [#allocation7]
        $region24: #{_net_forward.3} parent=11 // pred_fallthru
          _
      $region12: #{_net_forward.3} parent=5 // pred_fallthru
        _
      %p240 = scmp.lt.s32.totalorder %s17, 4
      // Predicated region
      $region25: #{_net_forward.3} parent=5 // pred_check
        %p241 = pneg %p240
      $region26: #{_net_forward.3} parent=5 // pred_check_branch
        %243 = sbr.rel (%p241) target = $region28
      $region27: #{_net_forward.3} parent=5 // pred_region
        // Predicated region
        $region29: #{_net_forward.3} parent=27 // pred_check
          %p244 = pneg %p49
        $region30: #{_net_forward.3} parent=27 // pred_check_branch
          %246 = sbr.rel (%p244) target = $region32
        $region31: #{_net_forward.3} parent=27 // pred_region
          %p247 = scmp.lt.s32.totalorder %s24, 1
          %s248 = scalar_select %p247, %s24, 1
          %s249 = smul.addr %s248, 2
          %s250 = smul.addr %s249, 8
          %s251 = scalar_lea.vmem %s0, %s250
        $region32: #{_net_forward.3} parent=27 // pred_fallthru
          _
        // Predicated region
        $region33: #{_net_forward.3} parent=27 // pred_check
          %p252 = pneg %p77
        $region34: #{_net_forward.3} parent=27 // pred_check_branch
          %254 = sbr.rel (%p252) target = $region36
        $region35: #{_net_forward.3} parent=27 // pred_region
          %s255 = sand.u32 %s67, 1
          %s256 = sand.u32 %s67, 1
          %s257 = smul.addr %s256, 96
          %s258 = scalar_lea.vmem [#allocation2], %s257
          %s259 = smul.u32 4, %s25
          %s260 = smul.addr %s24, 24
          %s261 = sadd.s32 %s259, %s260
          %s262 = smul.addr %s261, 8
          %s263 = scalar_lea.vmem %s1, %s262
          // Predicated region
          $region37: #{_net_forward.3} parent=35 // pred_check
            _
          $region38: #{_net_forward.3} parent=35 // pred_check_branch
            %265 = sbr.rel (0) target = $region40
          $region39: #{_net_forward.3} parent=35 // pred_region
            // Predicated region
            $region41: #{_net_forward.3} parent=39 // pred_check
              _
            $region42: #{_net_forward.3} parent=39 // pred_check_branch
              %267 = sbr.rel (0) target = $region44
            $region43: #{_net_forward.3} parent=39 // pred_region
              // Predicated region
              $region56: #{_net_forward.3} parent=43 // pred_check
                _
              $region57: #{_net_forward.3} parent=43 // pred_check_branch
                %304 = sbr.rel (0) target = $region59
              $region58: #{_net_forward.3} parent=43 // pred_region
                loop: start=0, step=1, limit=1
                $region60: #{_net_forward.3} parent=58 // loop_pre_header
                  _
                $region61: #{_net_forward.3} parent=58 // loop_header
                  %s306 = sphi 0, %s310
                  %p307 = scmp.ge.s32.totalorder %s306, 1
                  %s311 = sphi %s263, %s263
                  %s312 = sphi %s258, %s258
                $region62: #{_net_forward.3} parent=58 // loop_header_branch
                  %309 = sbr.rel (%p307) target = $region66
                $region63: #{_net_forward.3} parent=58 // loop_body
                  %v313 = vld [vmem:[%s311] sm:$0xff]
                  %314 = vst [vmem:[%s312] sm:$0xff] %v313
                  %v315 = vld [vmem:[%s311 + $0x8] sm:$0xff]
                  %316 = vst [vmem:[%s312 + $0x8] sm:$0xff] %v315
                  %v317 = vld [vmem:[%s311 + $0x10] sm:$0xff]
                  %318 = vst [vmem:[%s312 + $0x10] sm:$0xff] %v317
                  %v319 = vld [vmem:[%s311 + $0x18] sm:$0xff]
                  %320 = vst [vmem:[%s312 + $0x18] sm:$0xff] %v319
                  %v321 = vld [vmem:[%s311 + $0x40] sm:$0xff]
                  %322 = vst [vmem:[%s312 + $0x20] sm:$0xff] %v321
                  %v323 = vld [vmem:[%s311 + $0x48] sm:$0xff]
                  %324 = vst [vmem:[%s312 + $0x28] sm:$0xff] %v323
                  %v325 = vld [vmem:[%s311 + $0x50] sm:$0xff]
                  %326 = vst [vmem:[%s312 + $0x30] sm:$0xff] %v325
                  %v327 = vld [vmem:[%s311 + $0x58] sm:$0xff]
                  %328 = vst [vmem:[%s312 + $0x38] sm:$0xff] %v327
                  %v329 = vld [vmem:[%s311 + $0x80] sm:$0xff]
                  %330 = vst [vmem:[%s312 + $0x40] sm:$0xff] %v329
                  %v331 = vld [vmem:[%s311 + $0x88] sm:$0xff]
                  %332 = vst [vmem:[%s312 + $0x48] sm:$0xff] %v331
                  %v333 = vld [vmem:[%s311 + $0x90] sm:$0xff]
                  %334 = vst [vmem:[%s312 + $0x50] sm:$0xff] %v333
                  %v335 = vld [vmem:[%s311 + $0x98] sm:$0xff]
                  %336 = vst [vmem:[%s312 + $0x58] sm:$0xff] %v335
                $region64: #{_net_forward.3} parent=58 // loop_footer
                  %s310 = sadd.s32 1, %s306
                $region65: #{_net_forward.3} parent=58 // loop_footer_branch
                  %305 = sbr.rel target = $region61
                $region66: #{_net_forward.3} parent=58 // loop_exit
                  _
              $region59: #{_net_forward.3} parent=43 // pred_fallthru
                _
              // Predicated region
              $region67: #{_net_forward.3} parent=43 // pred_check
                _
              $region68: #{_net_forward.3} parent=43 // pred_check_branch
                %338 = sbr.rel target = $region70
              $region69: #{_net_forward.3} parent=43 // pred_region
                _
              $region70: #{_net_forward.3} parent=43 // pred_fallthru
                _
            $region44: #{_net_forward.3} parent=39 // pred_fallthru
              _
            // Predicated region
            $region45: #{_net_forward.3} parent=39 // pred_check
              _
            $region46: #{_net_forward.3} parent=39 // pred_check_branch
              %269 = sbr.rel target = $region48
            $region47: #{_net_forward.3} parent=39 // pred_region
              loop: start=0, step=1, limit=1
              $region49: #{_net_forward.3} parent=47 // loop_pre_header
                _
              $region50: #{_net_forward.3} parent=47 // loop_header
                %s272 = sphi 0, %s276
                %p273 = scmp.ge.s32.totalorder %s272, 1
                %s277 = sphi %s263, %s263
                %s278 = sphi %s258, %s258
              $region51: #{_net_forward.3} parent=47 // loop_header_branch
                %275 = sbr.rel (%p273) target = $region55
              $region52: #{_net_forward.3} parent=47 // loop_body
                %v279 = vld [vmem:[%s277] sm:$0xff]
                %280 = vst [vmem:[%s278] sm:$0xff] %v279
                %v281 = vld [vmem:[%s277 + $0x8] sm:$0xff]
                %282 = vst [vmem:[%s278 + $0x8] sm:$0xff] %v281
                %v283 = vld [vmem:[%s277 + $0x10] sm:$0xff]
                %284 = vst [vmem:[%s278 + $0x10] sm:$0xff] %v283
                %v285 = vld [vmem:[%s277 + $0x18] sm:$0xff]
                %286 = vst [vmem:[%s278 + $0x18] sm:$0xff] %v285
                %v287 = vld [vmem:[%s277 + $0x40] sm:$0xff]
                %288 = vst [vmem:[%s278 + $0x20] sm:$0xff] %v287
                %v289 = vld [vmem:[%s277 + $0x48] sm:$0xff]
                %290 = vst [vmem:[%s278 + $0x28] sm:$0xff] %v289
                %v291 = vld [vmem:[%s277 + $0x50] sm:$0xff]
                %292 = vst [vmem:[%s278 + $0x30] sm:$0xff] %v291
                %v293 = vld [vmem:[%s277 + $0x58] sm:$0xff]
                %294 = vst [vmem:[%s278 + $0x38] sm:$0xff] %v293
                %v295 = vld [vmem:[%s277 + $0x80] sm:$0xff]
                %296 = vst [vmem:[%s278 + $0x40] sm:$0xff] %v295
                %v297 = vld [vmem:[%s277 + $0x88] sm:$0xff]
                %298 = vst [vmem:[%s278 + $0x48] sm:$0xff] %v297
                %v299 = vld [vmem:[%s277 + $0x90] sm:$0xff]
                %300 = vst [vmem:[%s278 + $0x50] sm:$0xff] %v299
                %v301 = vld [vmem:[%s277 + $0x98] sm:$0xff]
                %302 = vst [vmem:[%s278 + $0x58] sm:$0xff] %v301
              $region53: #{_net_forward.3} parent=47 // loop_footer
                %s276 = sadd.s32 1, %s272
              $region54: #{_net_forward.3} parent=47 // loop_footer_branch
                %271 = sbr.rel target = $region50
              $region55: #{_net_forward.3} parent=47 // loop_exit
                _
            $region48: #{_net_forward.3} parent=39 // pred_fallthru
              _
          $region40: #{_net_forward.3} parent=35 // pred_fallthru
            _
          %339 = vnop
        $region36: #{_net_forward.3} parent=27 // pred_fallthru
          _
        // Predicated region
        $region71: #{_net_forward.3} parent=27 // pred_check
          %p340 = pneg %p103
        $region72: #{_net_forward.3} parent=27 // pred_check_branch
          %342 = sbr.rel (%p340) target = $region74
        $region73: #{_net_forward.3} parent=27 // pred_region
          %s343 = smul.u32 4, %s25
          %p344 = scmp.lt.s32.totalorder %s343, 7
          %s345 = scalar_select %p344, %s343, 7
          %s346 = smul.addr %s345, 8
          %s347 = scalar_lea.vmem %s2, %s346
          %s348 = smul.u32 4, %s25
        $region74: #{_net_forward.3} parent=27 // pred_fallthru
          _
      $region28: #{_net_forward.3} parent=5 // pred_fallthru
        _
      %p349 = scmp.le.s32.totalorder 1, %s17
      %p350 = scmp.lt.s32.totalorder %s17, 5
      %p351 = pnand %p349, %p350
      %p352 = pneg %p351
      // Predicated region
      $region75: #{_net_forward.3} parent=5 // pred_check
        _
      $region76: #{_net_forward.3} parent=5 // pred_check_branch
        %354 = sbr.rel (%p351) target = $region78
      $region77: #{_net_forward.3} parent=5 // pred_region
        %s355 = ssub.s32 %s17, 1
        %s356 = sand.u32 %s70, 1
        %s357 = sand.u32 %s70, 1
        %s358 = smul.addr %s357, 96
        %s359 = scalar_lea.vmem [#allocation2], %s358
        // Predicated region
        $region79: #{_net_forward.3} parent=77 // pred_check
          %p360 = pneg %p83
        $region80: #{_net_forward.3} parent=77 // pred_check_branch
          %362 = sbr.rel (%p360) target = $region82
        $region81: #{_net_forward.3} parent=77 // pred_region
          _
        $region82: #{_net_forward.3} parent=77 // pred_fallthru
          _
        // Predicated region
        $region83: #{_net_forward.3} parent=77 // pred_check
          %p363 = pneg %p151
        $region84: #{_net_forward.3} parent=77 // pred_check_branch
          %365 = sbr.rel (%p363) target = $region86
        $region85: #{_net_forward.3} parent=77 // pred_region
          %366 = dma.done [#allocation5], 64
        $region86: #{_net_forward.3} parent=77 // pred_fallthru
          _
        // Predicated region
        $region87: #{_net_forward.3} parent=77 // pred_check
          %p367 = pneg %p172
        $region88: #{_net_forward.3} parent=77 // pred_check_branch
          %369 = sbr.rel (%p367) target = $region90
        $region89: #{_net_forward.3} parent=77 // pred_region
          %370 = dma.done [#allocation7], 16
        $region90: #{_net_forward.3} parent=77 // pred_fallthru
          _
        %371 = sfence
        %p372 = scmp.lt.s32.totalorder %s26, 1
        %s373 = scalar_select %p372, %s26, 1
        %s374 = smul.addr %s373, 2
        %s375 = smul.addr %s374, 8
        %s376 = scalar_lea.vmem %s0, %s375
        %p377 = pneg %p55
        %p378 = pneg %p52
        %s379 = sand.u32 %s70, 1
        %s380 = sand.u32 %s70, 1
        %s381 = smul.addr %s380, 96
        %s382 = scalar_lea.vmem [#allocation2], %s381
        %p383 = pneg %p83
        %p384 = pneg %p80
        %s385 = smul.u32 4, %s27
        %p386 = scmp.lt.s32.totalorder %s385, 7
        %s387 = scalar_select %p386, %s385, 7
        %s388 = smul.addr %s387, 8
        %s389 = scalar_lea.vmem %s2, %s388
        %p390 = pneg %p109
        %p391 = pneg %p106
        %p392 = pneg %p130
        %p393 = pneg %p127
        %p394 = pneg %p151
        %p395 = pneg %p148
        %p396 = pneg %p172
        %p397 = pneg %p169
        %p398 = pneg %p200
        %p399 = pneg %p197
        %s400 = sand.u32 %s187, 1
        %s401 = scalar_lea.sflag [#allocation4], %s400
        %s402 = sand.u32 %s187, 1
        %s403 = smul.addr %s402, 256
        %s404 = scalar_lea.vmem [#allocation8], %s403
        %p405 = scmp.lt.s32.totalorder %s26, 1
        %s406 = scalar_select %p405, %s26, 1
        %s407 = smul.addr %s406, 2
        %s408 = smul.addr %s407, 8
        %s409 = scalar_lea.vmem %s0, %s408
        %s410 = smul.u32 4, %s27
        %s411 = smul.u32 4, %s27
        %p412 = scmp.lt.s32.totalorder %s411, 7
        %s413 = scalar_select %p412, %s411, 7
        %s414 = smul.addr %s413, 8
        %s415 = scalar_lea.vmem %s2, %s414
        %s416 = smul.u32 4, %s27
        %s417 = smul.u32 4, %s27
        %v418 = vld [vmem:[%s3] sm:$0x3]
        %v419 = vld [vmem:[%s415] sm:$0xff]
        %v420 = vld [vmem:[%s415 + $0x8] sm:$0xff]
        %v421 = vld [vmem:[%s415 + $0x10] sm:$0xff]
        %v422 = vld [vmem:[%s415 + $0x18] sm:$0xff]
        %v423 = vld [vmem:[%s409] sm:$0xff]
        %v424 = vld [vmem:[%s409 + $0x8] sm:$0xff]
        %vm425 = vcmask 15360
        %v427 = vsel %vm425, %v423, 0
        %v430 = vsel %vm425, %v424, 0
        %vm432 = vcmask 1041408
        %v434 = vsel %vm432, %v418, 0
        %436 = vmatprep.subr.mxu0 0.0
        %437 = vmatpush1.msra.mxu0 %v434
        %438 = vmatprep.subr.mxu0 0.0
        %439 = vmatpush1.msra.mxu0 0.0
        %440 = vmatprep.subr.mxu0 0.0
        %441 = vmatpush1.msra.mxu0 0.0
        %442 = vmatprep.subr.mxu0 0.0
        %443 = vmatpush1.msra.mxu0 0.0
        %444 = vmatprep.subr.mxu0 0.0
        %445 = vmatpush1.msra.mxu0 0.0
        %446 = vmatprep.subr.mxu0 0.0
        %447 = vmatpush1.msra.mxu0 0.0
        %448 = vmatprep.subr.mxu0 0.0
        %449 = vmatpush1.msra.mxu0 0.0
        %450 = vmatprep.subr.mxu0 0.0
        %451 = vmatpush1.msra.mxu0 0.0
        %452 = vmatprep.subr.mxu0 0.0
        %453 = vmatpush1.msra.mxu0 0.0
        %454 = vmatprep.subr.mxu0 0.0
        %455 = vmatpush1.msra.mxu0 0.0
        %456 = vmatprep.subr.mxu0 0.0
        %457 = vmatpush1.msra.mxu0 0.0
        %458 = vmatprep.subr.mxu0 0.0
        %459 = vmatpush1.msra.mxu0 0.0
        %460 = vmatprep.subr.mxu0 0.0
        %461 = vmatpush1.msra.mxu0 0.0
        %462 = vmatprep.subr.mxu0 0.0
        %463 = vmatpush1.msra.mxu0 0.0
        %464 = vmatprep.subr.mxu0 0.0
        %465 = vmatpush1.msra.mxu0 0.0
        %466 = vmatprep.subr.mxu0 0.0
        %467 = vmatpush1.msra.mxu0 0.0
        %468 = vmatprep.subr.mxu0 0.0
        %469 = vmatpush1.msra.mxu0 0.0
        %470 = vmatprep.subr.mxu0 0.0
        %471 = vmatpush1.msra.mxu0 0.0
        %472 = vmatprep.subr.mxu0 0.0
        %473 = vmatpush1.msra.mxu0 0.0
        %474 = vmatprep.subr.mxu0 0.0
        %475 = vmatpush1.msra.mxu0 0.0
        %476 = vmatprep.subr.mxu0 0.0
        %477 = vmatpush1.msra.mxu0 0.0
        %478 = vmatprep.subr.mxu0 0.0
        %479 = vmatpush1.msra.mxu0 0.0
        %480 = vmatprep.subr.mxu0 0.0
        %481 = vmatpush1.msra.mxu0 0.0
        %482 = vmatprep.subr.mxu0 0.0
        %483 = vmatpush1.msra.mxu0 0.0
        %484 = vmatprep.subr.mxu0 0.0
        %485 = vmatpush1.msra.mxu0 0.0
        %486 = vmatprep.subr.mxu0 0.0
        %487 = vmatpush1.msra.mxu0 0.0
        %488 = vmatprep.subr.mxu0 0.0
        %489 = vmatpush1.msra.mxu0 0.0
        %490 = vmatprep.subr.mxu0 0.0
        %491 = vmatpush1.msra.mxu0 0.0
        %492 = vmatprep.subr.mxu0 0.0
        %493 = vmatpush1.msra.mxu0 0.0
        %494 = vmatprep.subr.mxu0 0.0
        %495 = vmatpush1.msra.mxu0 0.0
        %496 = vmatprep.subr.mxu0 0.0
        %497 = vmatpush1.msra.mxu0 0.0
        %498 = vmatprep.subr.mxu0 0.0
        %499 = vmatpush1.msra.mxu0 0.0
        %500 = vmatprep.mubr.f32.mxu0 0.0
        %501 = vmatmul.mubr.f32.gmra.mrb[0].mxu0 %v427
        %v502 = vpop.f32.mrb[0].mxu0
        %v503 = vadd.f32 0.0, %v502
        %v504 = vpop.f32.mrb[0].mxu0
        %505 = vmatprep.mubr.f32.mxu0 0.0
        %506 = vmatmul.mubr.f32.gmra.mrb[0].mxu0 %v430
        %v507 = vpop.f32.mrb[0].mxu0
        %v508 = vadd.f32 0.0, %v507
        %v509 = vpop.f32.mrb[0].mxu0
        %510 = vdwg.mxu0
        %v511 = vld [vmem:[%s359] sm:$0xff]
        %v512 = vld [vmem:[%s359 + $0x8] sm:$0xff]
        %v513 = vld [vmem:[%s359 + $0x10] sm:$0xff]
        %v514 = vld [vmem:[%s359 + $0x18] sm:$0xff]
        %v515 = vld [vmem:[%s359 + $0x20] sm:$0xff]
        %v516 = vld [vmem:[%s359 + $0x28] sm:$0xff]
        %v517 = vld [vmem:[%s359 + $0x30] sm:$0xff]
        %v518 = vld [vmem:[%s359 + $0x38] sm:$0xff]
        %v519 = vld [vmem:[%s359 + $0x40] sm:$0xff]
        %v520 = vld [vmem:[%s359 + $0x48] sm:$0xff]
        %v521 = vld [vmem:[%s359 + $0x50] sm:$0xff]
        %v522 = vld [vmem:[%s359 + $0x58] sm:$0xff]
        %s523 = sld [smem:[#allocation3]]
        %v524 = vstv %s523
        %v525 = vmul.f32 %v511, %v524
        %v526 = vmul.f32 %v512, %v524
        %v527 = vmul.f32 %v513, %v524
        %v528 = vmul.f32 %v514, %v524
        %s529 = sld [smem:[#allocation3 + $0x80]]
        %v530 = vstv %s529
        %v531 = vmul.f32 %v515, %v530
        %v532 = vmul.f32 %v516, %v530
        %v533 = vmul.f32 %v517, %v530
        %v534 = vmul.f32 %v518, %v530
        %v535 = vadd.f32 %v525, %v531
        %v536 = vadd.f32 %v526, %v532
        %v537 = vadd.f32 %v527, %v533
        %v538 = vadd.f32 %v528, %v534
        %s539 = sld [smem:[#allocation3 + $0x100]]
        %v540 = vstv %s539
        %v541 = vmul.f32 %v519, %v540
        %v542 = vmul.f32 %v520, %v540
        %v543 = vmul.f32 %v521, %v540
        %v544 = vmul.f32 %v522, %v540
        %v545 = vadd.f32 %v535, %v541
        %v546 = vadd.f32 %v536, %v542
        %v547 = vadd.f32 %v537, %v543
        %v548 = vadd.f32 %v538, %v544
        %s549 = sld [smem:[#allocation6]]
        %v550 = vstv %s549
        %v551 = vadd.f32 %v545, %v550
        %v552 = vadd.f32 %v546, %v550
        %v553 = vadd.f32 %v547, %v550
        %v554 = vadd.f32 %v548, %v550
        %v556 = vsel %vm425, %v419, 0
        %v559 = vsel %vm425, %v420, 0
        %v562 = vsel %vm425, %v421, 0
        %v565 = vsel %vm425, %v422, 0
        %v568 = vsel %vm432, %v503, 0
        %570 = vmatprep.subr.mxu0 0.0
        %571 = vmatpush1.msra.mxu0 %v568
        %572 = vmatprep.subr.mxu0 0.0
        %573 = vmatpush1.msra.mxu0 0.0
        %574 = vmatprep.subr.mxu0 0.0
        %575 = vmatpush1.msra.mxu0 0.0
        %576 = vmatprep.subr.mxu0 0.0
        %577 = vmatpush1.msra.mxu0 0.0
        %578 = vmatprep.subr.mxu0 0.0
        %579 = vmatpush1.msra.mxu0 0.0
        %580 = vmatprep.subr.mxu0 0.0
        %581 = vmatpush1.msra.mxu0 0.0
        %582 = vmatprep.subr.mxu0 0.0
        %583 = vmatpush1.msra.mxu0 0.0
        %584 = vmatprep.subr.mxu0 0.0
        %585 = vmatpush1.msra.mxu0 0.0
        %586 = vmatprep.subr.mxu0 0.0
        %587 = vmatpush1.msra.mxu0 0.0
        %588 = vmatprep.subr.mxu0 0.0
        %589 = vmatpush1.msra.mxu0 0.0
        %590 = vmatprep.subr.mxu0 0.0
        %591 = vmatpush1.msra.mxu0 0.0
        %592 = vmatprep.subr.mxu0 0.0
        %593 = vmatpush1.msra.mxu0 0.0
        %594 = vmatprep.subr.mxu0 0.0
        %595 = vmatpush1.msra.mxu0 0.0
        %596 = vmatprep.subr.mxu0 0.0
        %597 = vmatpush1.msra.mxu0 0.0
        %598 = vmatprep.subr.mxu0 0.0
        %599 = vmatpush1.msra.mxu0 0.0
        %600 = vmatprep.subr.mxu0 0.0
        %601 = vmatpush1.msra.mxu0 0.0
        %602 = vmatprep.subr.mxu0 0.0
        %603 = vmatpush1.msra.mxu0 0.0
        %604 = vmatprep.subr.mxu0 0.0
        %605 = vmatpush1.msra.mxu0 0.0
        %606 = vmatprep.subr.mxu0 0.0
        %607 = vmatpush1.msra.mxu0 0.0
        %608 = vmatprep.subr.mxu0 0.0
        %609 = vmatpush1.msra.mxu0 0.0
        %610 = vmatprep.subr.mxu0 0.0
        %611 = vmatpush1.msra.mxu0 0.0
        %612 = vmatprep.subr.mxu0 0.0
        %613 = vmatpush1.msra.mxu0 0.0
        %614 = vmatprep.subr.mxu0 0.0
        %615 = vmatpush1.msra.mxu0 0.0
        %616 = vmatprep.subr.mxu0 0.0
        %617 = vmatpush1.msra.mxu0 0.0
        %618 = vmatprep.subr.mxu0 0.0
        %619 = vmatpush1.msra.mxu0 0.0
        %620 = vmatprep.subr.mxu0 0.0
        %621 = vmatpush1.msra.mxu0 0.0
        %622 = vmatprep.subr.mxu0 0.0
        %623 = vmatpush1.msra.mxu0 0.0
        %624 = vmatprep.subr.mxu0 0.0
        %625 = vmatpush1.msra.mxu0 0.0
        %626 = vmatprep.subr.mxu0 0.0
        %627 = vmatpush1.msra.mxu0 0.0
        %628 = vmatprep.subr.mxu0 0.0
        %629 = vmatpush1.msra.mxu0 0.0
        %630 = vmatprep.subr.mxu0 0.0
        %631 = vmatpush1.msra.mxu0 0.0
        %632 = vmatprep.subr.mxu0 0.0
        %633 = vmatpush1.msra.mxu0 0.0
        %634 = vmatprep.mubr.f32.mxu0 0.0
        %635 = vmatmul.mubr.f32.gmra.mrb[0].mxu0 %v556
        %v636 = vpop.f32.mrb[0].mxu0
        %v637 = vadd.f32 %v551, %v636
        %v638 = vpop.f32.mrb[0].mxu0
        %639 = vmatprep.mubr.f32.mxu0 0.0
        %640 = vmatmul.mubr.f32.gmra.mrb[0].mxu0 %v559
        %v641 = vpop.f32.mrb[0].mxu0
        %v642 = vadd.f32 %v552, %v641
        %v643 = vpop.f32.mrb[0].mxu0
        %644 = vmatprep.mubr.f32.mxu0 0.0
        %645 = vmatmul.mubr.f32.gmra.mrb[0].mxu0 %v562
        %v646 = vpop.f32.mrb[0].mxu0
        %v647 = vadd.f32 %v553, %v646
        %v648 = vpop.f32.mrb[0].mxu0
        %649 = vmatprep.mubr.f32.mxu0 0.0
        %650 = vmatmul.mubr.f32.gmra.mrb[0].mxu0 %v565
        %v651 = vpop.f32.mrb[0].mxu0
        %v652 = vadd.f32 %v554, %v651
        %v653 = vpop.f32.mrb[0].mxu0
        %654 = vdwg.mxu0
        %v655 = vmul.f32 %v637, %v511
        %v656 = vmul.f32 %v642, %v512
        %v657 = vmul.f32 %v647, %v513
        %v658 = vmul.f32 %v652, %v514
        %vm659 = vcmask 523264
        %660 = vst.msk [vmem:[%s404] sm:$0xff] %vm659, %v655
        %661 = vst.msk [vmem:[%s404 + $0x8] sm:$0xff] %vm659, %v656
        %662 = vst.msk [vmem:[%s404 + $0x10] sm:$0xff] %vm659, %v657
        %663 = vst.msk [vmem:[%s404 + $0x18] sm:$0xff] %vm659, %v658
        %s664 = sld [smem:[#allocation3 + $0x1]]
        %v665 = vstv %s664
        %v666 = vmul.f32 %v511, %v665
        %v667 = vmul.f32 %v512, %v665
        %v668 = vmul.f32 %v513, %v665
        %v669 = vmul.f32 %v514, %v665
        %s670 = sld [smem:[#allocation3 + $0x81]]
        %v671 = vstv %s670
        %v672 = vmul.f32 %v515, %v671
        %v673 = vmul.f32 %v516, %v671
        %v674 = vmul.f32 %v517, %v671
        %v675 = vmul.f32 %v518, %v671
        %v676 = vadd.f32 %v666, %v672
        %v677 = vadd.f32 %v667, %v673
        %v678 = vadd.f32 %v668, %v674
        %v679 = vadd.f32 %v669, %v675
        %s680 = sld [smem:[#allocation3 + $0x101]]
        %v681 = vstv %s680
        %v682 = vmul.f32 %v519, %v681
        %v683 = vmul.f32 %v520, %v681
        %v684 = vmul.f32 %v521, %v681
        %v685 = vmul.f32 %v522, %v681
        %v686 = vadd.f32 %v676, %v682
        %v687 = vadd.f32 %v677, %v683
        %v688 = vadd.f32 %v678, %v684
        %v689 = vadd.f32 %v679, %v685
        %s690 = sld [smem:[#allocation6 + $0x1]]
        %v691 = vstv %s690
        %v692 = vadd.f32 %v686, %v691
        %v693 = vadd.f32 %v687, %v691
        %v694 = vadd.f32 %v688, %v691
        %v695 = vadd.f32 %v689, %v691
        %v696 = vrot.slane %v503, 2
        %v697 = vsel %vm432, %v696, 0
        %699 = vmatprep.subr.mxu0 0.0
        %700 = vmatpush1.msra.mxu0 %v697
        %701 = vmatprep.subr.mxu0 0.0
        %702 = vmatpush1.msra.mxu0 0.0
        %703 = vmatprep.subr.mxu0 0.0
        %704 = vmatpush1.msra.mxu0 0.0
        %705 = vmatprep.subr.mxu0 0.0
        %706 = vmatpush1.msra.mxu0 0.0
        %707 = vmatprep.subr.mxu0 0.0
        %708 = vmatpush1.msra.mxu0 0.0
        %709 = vmatprep.subr.mxu0 0.0
        %710 = vmatpush1.msra.mxu0 0.0
        %711 = vmatprep.subr.mxu0 0.0
        %712 = vmatpush1.msra.mxu0 0.0
        %713 = vmatprep.subr.mxu0 0.0
        %714 = vmatpush1.msra.mxu0 0.0
        %715 = vmatprep.subr.mxu0 0.0
        %716 = vmatpush1.msra.mxu0 0.0
        %717 = vmatprep.subr.mxu0 0.0
        %718 = vmatpush1.msra.mxu0 0.0
        %719 = vmatprep.subr.mxu0 0.0
        %720 = vmatpush1.msra.mxu0 0.0
        %721 = vmatprep.subr.mxu0 0.0
        %722 = vmatpush1.msra.mxu0 0.0
        %723 = vmatprep.subr.mxu0 0.0
        %724 = vmatpush1.msra.mxu0 0.0
        %725 = vmatprep.subr.mxu0 0.0
        %726 = vmatpush1.msra.mxu0 0.0
        %727 = vmatprep.subr.mxu0 0.0
        %728 = vmatpush1.msra.mxu0 0.0
        %729 = vmatprep.subr.mxu0 0.0
        %730 = vmatpush1.msra.mxu0 0.0
        %731 = vmatprep.subr.mxu0 0.0
        %732 = vmatpush1.msra.mxu0 0.0
        %733 = vmatprep.subr.mxu0 0.0
        %734 = vmatpush1.msra.mxu0 0.0
        %735 = vmatprep.subr.mxu0 0.0
        %736 = vmatpush1.msra.mxu0 0.0
        %737 = vmatprep.subr.mxu0 0.0
        %738 = vmatpush1.msra.mxu0 0.0
        %739 = vmatprep.subr.mxu0 0.0
        %740 = vmatpush1.msra.mxu0 0.0
        %741 = vmatprep.subr.mxu0 0.0
        %742 = vmatpush1.msra.mxu0 0.0
        %743 = vmatprep.subr.mxu0 0.0
        %744 = vmatpush1.msra.mxu0 0.0
        %745 = vmatprep.subr.mxu0 0.0
        %746 = vmatpush1.msra.mxu0 0.0
        %747 = vmatprep.subr.mxu0 0.0
        %748 = vmatpush1.msra.mxu0 0.0
        %749 = vmatprep.subr.mxu0 0.0
        %750 = vmatpush1.msra.mxu0 0.0
        %751 = vmatprep.subr.mxu0 0.0
        %752 = vmatpush1.msra.mxu0 0.0
        %753 = vmatprep.subr.mxu0 0.0
        %754 = vmatpush1.msra.mxu0 0.0
        %755 = vmatprep.subr.mxu0 0.0
        %756 = vmatpush1.msra.mxu0 0.0
        %757 = vmatprep.subr.mxu0 0.0
        %758 = vmatpush1.msra.mxu0 0.0
        %759 = vmatprep.subr.mxu0 0.0
        %760 = vmatpush1.msra.mxu0 0.0
        %761 = vmatprep.subr.mxu0 0.0
        %762 = vmatpush1.msra.mxu0 0.0
        %763 = vmatprep.mubr.f32.mxu0 0.0
        %764 = vmatmul.mubr.f32.gmra.mrb[0].mxu0 %v556
        %v765 = vpop.f32.mrb[0].mxu0
        %v766 = vadd.f32 %v692, %v765
        %v767 = vpop.f32.mrb[0].mxu0
        %768 = vmatprep.mubr.f32.mxu0 0.0
        %769 = vmatmul.mubr.f32.gmra.mrb[0].mxu0 %v559
        %v770 = vpop.f32.mrb[0].mxu0
        %v771 = vadd.f32 %v693, %v770
        %v772 = vpop.f32.mrb[0].mxu0
        %773 = vmatprep.mubr.f32.mxu0 0.0
        %774 = vmatmul.mubr.f32.gmra.mrb[0].mxu0 %v562
        %v775 = vpop.f32.mrb[0].mxu0
        %v776 = vadd.f32 %v694, %v775
        %v777 = vpop.f32.mrb[0].mxu0
        %778 = vmatprep.mubr.f32.mxu0 0.0
        %779 = vmatmul.mubr.f32.gmra.mrb[0].mxu0 %v565
        %v780 = vpop.f32.mrb[0].mxu0
        %v781 = vadd.f32 %v695, %v780
        %v782 = vpop.f32.mrb[0].mxu0
        %783 = vdwg.mxu0
        %v784 = vmul.f32 %v766, %v511
        %v785 = vmul.f32 %v771, %v512
        %v786 = vmul.f32 %v776, %v513
        %v787 = vmul.f32 %v781, %v514
        %s788 = scalar_lea.vmem %s404, 32 [#allocation8]
        %789 = vst.msk [vmem:[%s788] sm:$0xff] %vm659, %v784
        %790 = vst.msk [vmem:[%s788 + $0x8] sm:$0xff] %vm659, %v785
        %791 = vst.msk [vmem:[%s788 + $0x10] sm:$0xff] %vm659, %v786
        %792 = vst.msk [vmem:[%s788 + $0x18] sm:$0xff] %vm659, %v787
        %s793 = sld [smem:[#allocation3 + $0x2]]
        %v794 = vstv %s793
        %v795 = vmul.f32 %v511, %v794
        %v796 = vmul.f32 %v512, %v794
        %v797 = vmul.f32 %v513, %v794
        %v798 = vmul.f32 %v514, %v794
        %s799 = sld [smem:[#allocation3 + $0x82]]
        %v800 = vstv %s799
        %v801 = vmul.f32 %v515, %v800
        %v802 = vmul.f32 %v516, %v800
        %v803 = vmul.f32 %v517, %v800
        %v804 = vmul.f32 %v518, %v800
        %v805 = vadd.f32 %v795, %v801
        %v806 = vadd.f32 %v796, %v802
        %v807 = vadd.f32 %v797, %v803
        %v808 = vadd.f32 %v798, %v804
        %s809 = sld [smem:[#allocation3 + $0x102]]
        %v810 = vstv %s809
        %v811 = vmul.f32 %v519, %v810
        %v812 = vmul.f32 %v520, %v810
        %v813 = vmul.f32 %v521, %v810
        %v814 = vmul.f32 %v522, %v810
        %v815 = vadd.f32 %v805, %v811
        %v816 = vadd.f32 %v806, %v812
        %v817 = vadd.f32 %v807, %v813
        %v818 = vadd.f32 %v808, %v814
        %s819 = sld [smem:[#allocation6 + $0x2]]
        %v820 = vstv %s819
        %v821 = vadd.f32 %v815, %v820
        %v822 = vadd.f32 %v816, %v820
        %v823 = vadd.f32 %v817, %v820
        %v824 = vadd.f32 %v818, %v820
        %v825 = vrot.slane %v503, 4
        %v826 = vsel %vm432, %v825, 0
        %828 = vmatprep.subr.mxu0 0.0
        %829 = vmatpush1.msra.mxu0 %v826
        %830 = vmatprep.subr.mxu0 0.0
        %831 = vmatpush1.msra.mxu0 0.0
        %832 = vmatprep.subr.mxu0 0.0
        %833 = vmatpush1.msra.mxu0 0.0
        %834 = vmatprep.subr.mxu0 0.0
        %835 = vmatpush1.msra.mxu0 0.0
        %836 = vmatprep.subr.mxu0 0.0
        %837 = vmatpush1.msra.mxu0 0.0
        %838 = vmatprep.subr.mxu0 0.0
        %839 = vmatpush1.msra.mxu0 0.0
        %840 = vmatprep.subr.mxu0 0.0
        %841 = vmatpush1.msra.mxu0 0.0
        %842 = vmatprep.subr.mxu0 0.0
        %843 = vmatpush1.msra.mxu0 0.0
        %844 = vmatprep.subr.mxu0 0.0
        %845 = vmatpush1.msra.mxu0 0.0
        %846 = vmatprep.subr.mxu0 0.0
        %847 = vmatpush1.msra.mxu0 0.0
        %848 = vmatprep.subr.mxu0 0.0
        %849 = vmatpush1.msra.mxu0 0.0
        %850 = vmatprep.subr.mxu0 0.0
        %851 = vmatpush1.msra.mxu0 0.0
        %852 = vmatprep.subr.mxu0 0.0
        %853 = vmatpush1.msra.mxu0 0.0
        %854 = vmatprep.subr.mxu0 0.0
        %855 = vmatpush1.msra.mxu0 0.0
        %856 = vmatprep.subr.mxu0 0.0
        %857 = vmatpush1.msra.mxu0 0.0
        %858 = vmatprep.subr.mxu0 0.0
        %859 = vmatpush1.msra.mxu0 0.0
        %860 = vmatprep.subr.mxu0 0.0
        %861 = vmatpush1.msra.mxu0 0.0
        %862 = vmatprep.subr.mxu0 0.0
        %863 = vmatpush1.msra.mxu0 0.0
        %864 = vmatprep.subr.mxu0 0.0
        %865 = vmatpush1.msra.mxu0 0.0
        %866 = vmatprep.subr.mxu0 0.0
        %867 = vmatpush1.msra.mxu0 0.0
        %868 = vmatprep.subr.mxu0 0.0
        %869 = vmatpush1.msra.mxu0 0.0
        %870 = vmatprep.subr.mxu0 0.0
        %871 = vmatpush1.msra.mxu0 0.0
        %872 = vmatprep.subr.mxu0 0.0
        %873 = vmatpush1.msra.mxu0 0.0
        %874 = vmatprep.subr.mxu0 0.0
        %875 = vmatpush1.msra.mxu0 0.0
        %876 = vmatprep.subr.mxu0 0.0
        %877 = vmatpush1.msra.mxu0 0.0
        %878 = vmatprep.subr.mxu0 0.0
        %879 = vmatpush1.msra.mxu0 0.0
        %880 = vmatprep.subr.mxu0 0.0
        %881 = vmatpush1.msra.mxu0 0.0
        %882 = vmatprep.subr.mxu0 0.0
        %883 = vmatpush1.msra.mxu0 0.0
        %884 = vmatprep.subr.mxu0 0.0
        %885 = vmatpush1.msra.mxu0 0.0
        %886 = vmatprep.subr.mxu0 0.0
        %887 = vmatpush1.msra.mxu0 0.0
        %888 = vmatprep.subr.mxu0 0.0
        %889 = vmatpush1.msra.mxu0 0.0
        %890 = vmatprep.subr.mxu0 0.0
        %891 = vmatpush1.msra.mxu0 0.0
        %892 = vmatprep.mubr.f32.mxu0 0.0
        %893 = vmatmul.mubr.f32.gmra.mrb[0].mxu0 %v556
        %v894 = vpop.f32.mrb[0].mxu0
        %v895 = vadd.f32 %v821, %v894
        %v896 = vpop.f32.mrb[0].mxu0
        %897 = vmatprep.mubr.f32.mxu0 0.0
        %898 = vmatmul.mubr.f32.gmra.mrb[0].mxu0 %v559
        %v899 = vpop.f32.mrb[0].mxu0
        %v900 = vadd.f32 %v822, %v899
        %v901 = vpop.f32.mrb[0].mxu0
        %902 = vmatprep.mubr.f32.mxu0 0.0
        %903 = vmatmul.mubr.f32.gmra.mrb[0].mxu0 %v562
        %v904 = vpop.f32.mrb[0].mxu0
        %v905 = vadd.f32 %v823, %v904
        %v906 = vpop.f32.mrb[0].mxu0
        %907 = vmatprep.mubr.f32.mxu0 0.0
        %908 = vmatmul.mubr.f32.gmra.mrb[0].mxu0 %v565
        %v909 = vpop.f32.mrb[0].mxu0
        %v910 = vadd.f32 %v824, %v909
        %v911 = vpop.f32.mrb[0].mxu0
        %912 = vdwg.mxu0
        %v913 = vmul.f32 %v895, %v511
        %v914 = vmul.f32 %v900, %v512
        %v915 = vmul.f32 %v905, %v513
        %v916 = vmul.f32 %v910, %v514
        %s917 = scalar_lea.vmem %s404, 64 [#allocation8]
        %918 = vst.msk [vmem:[%s917] sm:$0xff] %vm659, %v913
        %919 = vst.msk [vmem:[%s917 + $0x8] sm:$0xff] %vm659, %v914
        %920 = vst.msk [vmem:[%s917 + $0x10] sm:$0xff] %vm659, %v915
        %921 = vst.msk [vmem:[%s917 + $0x18] sm:$0xff] %vm659, %v916
        %s922 = sld [smem:[#allocation3 + $0x3]]
        %v923 = vstv %s922
        %v924 = vmul.f32 %v511, %v923
        %v925 = vmul.f32 %v512, %v923
        %v926 = vmul.f32 %v513, %v923
        %v927 = vmul.f32 %v514, %v923
        %s928 = sld [smem:[#allocation3 + $0x83]]
        %v929 = vstv %s928
        %v930 = vmul.f32 %v515, %v929
        %v931 = vmul.f32 %v516, %v929
        %v932 = vmul.f32 %v517, %v929
        %v933 = vmul.f32 %v518, %v929
        %v934 = vadd.f32 %v924, %v930
        %v935 = vadd.f32 %v925, %v931
        %v936 = vadd.f32 %v926, %v932
        %v937 = vadd.f32 %v927, %v933
        %s938 = sld [smem:[#allocation3 + $0x103]]
        %v939 = vstv %s938
        %v940 = vmul.f32 %v519, %v939
        %v941 = vmul.f32 %v520, %v939
        %v942 = vmul.f32 %v521, %v939
        %v943 = vmul.f32 %v522, %v939
        %v944 = vadd.f32 %v934, %v940
        %v945 = vadd.f32 %v935, %v941
        %v946 = vadd.f32 %v936, %v942
        %v947 = vadd.f32 %v937, %v943
        %s948 = sld [smem:[#allocation6 + $0x3]]
        %v949 = vstv %s948
        %v950 = vadd.f32 %v944, %v949
        %v951 = vadd.f32 %v945, %v949
        %v952 = vadd.f32 %v946, %v949
        %v953 = vadd.f32 %v947, %v949
        %v954 = vrot.slane %v503, 6
        %v955 = vsel %vm432, %v954, 0
        %957 = vmatprep.subr.mxu0 0.0
        %958 = vmatpush1.msra.mxu0 %v955
        %959 = vmatprep.subr.mxu0 0.0
        %960 = vmatpush1.msra.mxu0 0.0
        %961 = vmatprep.subr.mxu0 0.0
        %962 = vmatpush1.msra.mxu0 0.0
        %963 = vmatprep.subr.mxu0 0.0
        %964 = vmatpush1.msra.mxu0 0.0
        %965 = vmatprep.subr.mxu0 0.0
        %966 = vmatpush1.msra.mxu0 0.0
        %967 = vmatprep.subr.mxu0 0.0
        %968 = vmatpush1.msra.mxu0 0.0
        %969 = vmatprep.subr.mxu0 0.0
        %970 = vmatpush1.msra.mxu0 0.0
        %971 = vmatprep.subr.mxu0 0.0
        %972 = vmatpush1.msra.mxu0 0.0
        %973 = vmatprep.subr.mxu0 0.0
        %974 = vmatpush1.msra.mxu0 0.0
        %975 = vmatprep.subr.mxu0 0.0
        %976 = vmatpush1.msra.mxu0 0.0
        %977 = vmatprep.subr.mxu0 0.0
        %978 = vmatpush1.msra.mxu0 0.0
        %979 = vmatprep.subr.mxu0 0.0
        %980 = vmatpush1.msra.mxu0 0.0
        %981 = vmatprep.subr.mxu0 0.0
        %982 = vmatpush1.msra.mxu0 0.0
        %983 = vmatprep.subr.mxu0 0.0
        %984 = vmatpush1.msra.mxu0 0.0
        %985 = vmatprep.subr.mxu0 0.0
        %986 = vmatpush1.msra.mxu0 0.0
        %987 = vmatprep.subr.mxu0 0.0
        %988 = vmatpush1.msra.mxu0 0.0
        %989 = vmatprep.subr.mxu0 0.0
        %990 = vmatpush1.msra.mxu0 0.0
        %991 = vmatprep.subr.mxu0 0.0
        %992 = vmatpush1.msra.mxu0 0.0
        %993 = vmatprep.subr.mxu0 0.0
        %994 = vmatpush1.msra.mxu0 0.0
        %995 = vmatprep.subr.mxu0 0.0
        %996 = vmatpush1.msra.mxu0 0.0
        %997 = vmatprep.subr.mxu0 0.0
        %998 = vmatpush1.msra.mxu0 0.0
        %999 = vmatprep.subr.mxu0 0.0
        %1000 = vmatpush1.msra.mxu0 0.0
        %1001 = vmatprep.subr.mxu0 0.0
        %1002 = vmatpush1.msra.mxu0 0.0
        %1003 = vmatprep.subr.mxu0 0.0
        %1004 = vmatpush1.msra.mxu0 0.0
        %1005 = vmatprep.subr.mxu0 0.0
        %1006 = vmatpush1.msra.mxu0 0.0
        %1007 = vmatprep.subr.mxu0 0.0
        %1008 = vmatpush1.msra.mxu0 0.0
        %1009 = vmatprep.subr.mxu0 0.0
        %1010 = vmatpush1.msra.mxu0 0.0
        %1011 = vmatprep.subr.mxu0 0.0
        %1012 = vmatpush1.msra.mxu0 0.0
        %1013 = vmatprep.subr.mxu0 0.0
        %1014 = vmatpush1.msra.mxu0 0.0
        %1015 = vmatprep.subr.mxu0 0.0
        %1016 = vmatpush1.msra.mxu0 0.0
        %1017 = vmatprep.subr.mxu0 0.0
        %1018 = vmatpush1.msra.mxu0 0.0
        %1019 = vmatprep.subr.mxu0 0.0
        %1020 = vmatpush1.msra.mxu0 0.0
        %1021 = vmatprep.mubr.f32.mxu0 0.0
        %1022 = vmatmul.mubr.f32.gmra.mrb[0].mxu0 %v556
        %v1023 = vpop.f32.mrb[0].mxu0
        %v1024 = vadd.f32 %v950, %v1023
        %v1025 = vpop.f32.mrb[0].mxu0
        %1026 = vmatprep.mubr.f32.mxu0 0.0
        %1027 = vmatmul.mubr.f32.gmra.mrb[0].mxu0 %v559
        %v1028 = vpop.f32.mrb[0].mxu0
        %v1029 = vadd.f32 %v951, %v1028
        %v1030 = vpop.f32.mrb[0].mxu0
        %1031 = vmatprep.mubr.f32.mxu0 0.0
        %1032 = vmatmul.mubr.f32.gmra.mrb[0].mxu0 %v562
        %v1033 = vpop.f32.mrb[0].mxu0
        %v1034 = vadd.f32 %v952, %v1033
        %v1035 = vpop.f32.mrb[0].mxu0
        %1036 = vmatprep.mubr.f32.mxu0 0.0
        %1037 = vmatmul.mubr.f32.gmra.mrb[0].mxu0 %v565
        %v1038 = vpop.f32.mrb[0].mxu0
        %v1039 = vadd.f32 %v953, %v1038
        %v1040 = vpop.f32.mrb[0].mxu0
        %1041 = vdwg.mxu0
        %v1042 = vmul.f32 %v1024, %v511
        %v1043 = vmul.f32 %v1029, %v512
        %v1044 = vmul.f32 %v1034, %v513
        %v1045 = vmul.f32 %v1039, %v514
        %s1046 = scalar_lea.vmem %s404, 96 [#allocation8]
        %1047 = vst.msk [vmem:[%s1046] sm:$0xff] %vm659, %v1042
        %1048 = vst.msk [vmem:[%s1046 + $0x8] sm:$0xff] %vm659, %v1043
        %1049 = vst.msk [vmem:[%s1046 + $0x10] sm:$0xff] %vm659, %v1044
        %1050 = vst.msk [vmem:[%s1046 + $0x18] sm:$0xff] %vm659, %v1045
        %s1051 = sld [smem:[#allocation3 + $0x4]]
        %v1052 = vstv %s1051
        %v1053 = vmul.f32 %v511, %v1052
        %v1054 = vmul.f32 %v512, %v1052
        %v1055 = vmul.f32 %v513, %v1052
        %v1056 = vmul.f32 %v514, %v1052
        %s1057 = sld [smem:[#allocation3 + $0x84]]
        %v1058 = vstv %s1057
        %v1059 = vmul.f32 %v515, %v1058
        %v1060 = vmul.f32 %v516, %v1058
        %v1061 = vmul.f32 %v517, %v1058
        %v1062 = vmul.f32 %v518, %v1058
        %v1063 = vadd.f32 %v1053, %v1059
        %v1064 = vadd.f32 %v1054, %v1060
        %v1065 = vadd.f32 %v1055, %v1061
        %v1066 = vadd.f32 %v1056, %v1062
        %s1067 = sld [smem:[#allocation3 + $0x104]]
        %v1068 = vstv %s1067
        %v1069 = vmul.f32 %v519, %v1068
        %v1070 = vmul.f32 %v520, %v1068
        %v1071 = vmul.f32 %v521, %v1068
        %v1072 = vmul.f32 %v522, %v1068
        %v1073 = vadd.f32 %v1063, %v1069
        %v1074 = vadd.f32 %v1064, %v1070
        %v1075 = vadd.f32 %v1065, %v1071
        %v1076 = vadd.f32 %v1066, %v1072
        %s1077 = sld [smem:[#allocation6 + $0x4]]
        %v1078 = vstv %s1077
        %v1079 = vadd.f32 %v1073, %v1078
        %v1080 = vadd.f32 %v1074, %v1078
        %v1081 = vadd.f32 %v1075, %v1078
        %v1082 = vadd.f32 %v1076, %v1078
        %v1084 = vsel %vm432, %v508, 0
        %1086 = vmatprep.subr.mxu0 0.0
        %1087 = vmatpush1.msra.mxu0 %v1084
        %1088 = vmatprep.subr.mxu0 0.0
        %1089 = vmatpush1.msra.mxu0 0.0
        %1090 = vmatprep.subr.mxu0 0.0
        %1091 = vmatpush1.msra.mxu0 0.0
        %1092 = vmatprep.subr.mxu0 0.0
        %1093 = vmatpush1.msra.mxu0 0.0
        %1094 = vmatprep.subr.mxu0 0.0
        %1095 = vmatpush1.msra.mxu0 0.0
        %1096 = vmatprep.subr.mxu0 0.0
        %1097 = vmatpush1.msra.mxu0 0.0
        %1098 = vmatprep.subr.mxu0 0.0
        %1099 = vmatpush1.msra.mxu0 0.0
        %1100 = vmatprep.subr.mxu0 0.0
        %1101 = vmatpush1.msra.mxu0 0.0
        %1102 = vmatprep.subr.mxu0 0.0
        %1103 = vmatpush1.msra.mxu0 0.0
        %1104 = vmatprep.subr.mxu0 0.0
        %1105 = vmatpush1.msra.mxu0 0.0
        %1106 = vmatprep.subr.mxu0 0.0
        %1107 = vmatpush1.msra.mxu0 0.0
        %1108 = vmatprep.subr.mxu0 0.0
        %1109 = vmatpush1.msra.mxu0 0.0
        %1110 = vmatprep.subr.mxu0 0.0
        %1111 = vmatpush1.msra.mxu0 0.0
        %1112 = vmatprep.subr.mxu0 0.0
        %1113 = vmatpush1.msra.mxu0 0.0
        %1114 = vmatprep.subr.mxu0 0.0
        %1115 = vmatpush1.msra.mxu0 0.0
        %1116 = vmatprep.subr.mxu0 0.0
        %1117 = vmatpush1.msra.mxu0 0.0
        %1118 = vmatprep.subr.mxu0 0.0
        %1119 = vmatpush1.msra.mxu0 0.0
        %1120 = vmatprep.subr.mxu0 0.0
        %1121 = vmatpush1.msra.mxu0 0.0
        %1122 = vmatprep.subr.mxu0 0.0
        %1123 = vmatpush1.msra.mxu0 0.0
        %1124 = vmatprep.subr.mxu0 0.0
        %1125 = vmatpush1.msra.mxu0 0.0
        %1126 = vmatprep.subr.mxu0 0.0
        %1127 = vmatpush1.msra.mxu0 0.0
        %1128 = vmatprep.subr.mxu0 0.0
        %1129 = vmatpush1.msra.mxu0 0.0
        %1130 = vmatprep.subr.mxu0 0.0
        %1131 = vmatpush1.msra.mxu0 0.0
        %1132 = vmatprep.subr.mxu0 0.0
        %1133 = vmatpush1.msra.mxu0 0.0
        %1134 = vmatprep.subr.mxu0 0.0
        %1135 = vmatpush1.msra.mxu0 0.0
        %1136 = vmatprep.subr.mxu0 0.0
        %1137 = vmatpush1.msra.mxu0 0.0
        %1138 = vmatprep.subr.mxu0 0.0
        %1139 = vmatpush1.msra.mxu0 0.0
        %1140 = vmatprep.subr.mxu0 0.0
        %1141 = vmatpush1.msra.mxu0 0.0
        %1142 = vmatprep.subr.mxu0 0.0
        %1143 = vmatpush1.msra.mxu0 0.0
        %1144 = vmatprep.subr.mxu0 0.0
        %1145 = vmatpush1.msra.mxu0 0.0
        %1146 = vmatprep.subr.mxu0 0.0
        %1147 = vmatpush1.msra.mxu0 0.0
        %1148 = vmatprep.subr.mxu0 0.0
        %1149 = vmatpush1.msra.mxu0 0.0
        %1150 = vmatprep.mubr.f32.mxu0 0.0
        %1151 = vmatmul.mubr.f32.gmra.mrb[0].mxu0 %v556
        %v1152 = vpop.f32.mrb[0].mxu0
        %v1153 = vadd.f32 %v1079, %v1152
        %v1154 = vpop.f32.mrb[0].mxu0
        %1155 = vmatprep.mubr.f32.mxu0 0.0
        %1156 = vmatmul.mubr.f32.gmra.mrb[0].mxu0 %v559
        %v1157 = vpop.f32.mrb[0].mxu0
        %v1158 = vadd.f32 %v1080, %v1157
        %v1159 = vpop.f32.mrb[0].mxu0
        %1160 = vmatprep.mubr.f32.mxu0 0.0
        %1161 = vmatmul.mubr.f32.gmra.mrb[0].mxu0 %v562
        %v1162 = vpop.f32.mrb[0].mxu0
        %v1163 = vadd.f32 %v1081, %v1162
        %v1164 = vpop.f32.mrb[0].mxu0
        %1165 = vmatprep.mubr.f32.mxu0 0.0
        %1166 = vmatmul.mubr.f32.gmra.mrb[0].mxu0 %v565
        %v1167 = vpop.f32.mrb[0].mxu0
        %v1168 = vadd.f32 %v1082, %v1167
        %v1169 = vpop.f32.mrb[0].mxu0
        %1170 = vdwg.mxu0
        %v1171 = vmul.f32 %v1153, %v511
        %v1172 = vmul.f32 %v1158, %v512
        %v1173 = vmul.f32 %v1163, %v513
        %v1174 = vmul.f32 %v1168, %v514
        %s1175 = scalar_lea.vmem %s404, 128 [#allocation8]
        %1176 = vst.msk [vmem:[%s1175] sm:$0xff] %vm659, %v1171
        %1177 = vst.msk [vmem:[%s1175 + $0x8] sm:$0xff] %vm659, %v1172
        %1178 = vst.msk [vmem:[%s1175 + $0x10] sm:$0xff] %vm659, %v1173
        %1179 = vst.msk [vmem:[%s1175 + $0x18] sm:$0xff] %vm659, %v1174
        %s1180 = sld [smem:[#allocation3 + $0x5]]
        %v1181 = vstv %s1180
        %v1182 = vmul.f32 %v511, %v1181
        %v1183 = vmul.f32 %v512, %v1181
        %v1184 = vmul.f32 %v513, %v1181
        %v1185 = vmul.f32 %v514, %v1181
        %s1186 = sld [smem:[#allocation3 + $0x85]]
        %v1187 = vstv %s1186
        %v1188 = vmul.f32 %v515, %v1187
        %v1189 = vmul.f32 %v516, %v1187
        %v1190 = vmul.f32 %v517, %v1187
        %v1191 = vmul.f32 %v518, %v1187
        %v1192 = vadd.f32 %v1182, %v1188
        %v1193 = vadd.f32 %v1183, %v1189
        %v1194 = vadd.f32 %v1184, %v1190
        %v1195 = vadd.f32 %v1185, %v1191
        %s1196 = sld [smem:[#allocation3 + $0x105]]
        %v1197 = vstv %s1196
        %v1198 = vmul.f32 %v519, %v1197
        %v1199 = vmul.f32 %v520, %v1197
        %v1200 = vmul.f32 %v521, %v1197
        %v1201 = vmul.f32 %v522, %v1197
        %v1202 = vadd.f32 %v1192, %v1198
        %v1203 = vadd.f32 %v1193, %v1199
        %v1204 = vadd.f32 %v1194, %v1200
        %v1205 = vadd.f32 %v1195, %v1201
        %s1206 = sld [smem:[#allocation6 + $0x5]]
        %v1207 = vstv %s1206
        %v1208 = vadd.f32 %v1202, %v1207
        %v1209 = vadd.f32 %v1203, %v1207
        %v1210 = vadd.f32 %v1204, %v1207
        %v1211 = vadd.f32 %v1205, %v1207
        %v1212 = vrot.slane %v508, 2
        %v1213 = vsel %vm432, %v1212, 0
        %1215 = vmatprep.subr.mxu0 0.0
        %1216 = vmatpush1.msra.mxu0 %v1213
        %1217 = vmatprep.subr.mxu0 0.0
        %1218 = vmatpush1.msra.mxu0 0.0
        %1219 = vmatprep.subr.mxu0 0.0
        %1220 = vmatpush1.msra.mxu0 0.0
        %1221 = vmatprep.subr.mxu0 0.0
        %1222 = vmatpush1.msra.mxu0 0.0
        %1223 = vmatprep.subr.mxu0 0.0
        %1224 = vmatpush1.msra.mxu0 0.0
        %1225 = vmatprep.subr.mxu0 0.0
        %1226 = vmatpush1.msra.mxu0 0.0
        %1227 = vmatprep.subr.mxu0 0.0
        %1228 = vmatpush1.msra.mxu0 0.0
        %1229 = vmatprep.subr.mxu0 0.0
        %1230 = vmatpush1.msra.mxu0 0.0
        %1231 = vmatprep.subr.mxu0 0.0
        %1232 = vmatpush1.msra.mxu0 0.0
        %1233 = vmatprep.subr.mxu0 0.0
        %1234 = vmatpush1.msra.mxu0 0.0
        %1235 = vmatprep.subr.mxu0 0.0
        %1236 = vmatpush1.msra.mxu0 0.0
        %1237 = vmatprep.subr.mxu0 0.0
        %1238 = vmatpush1.msra.mxu0 0.0
        %1239 = vmatprep.subr.mxu0 0.0
        %1240 = vmatpush1.msra.mxu0 0.0
        %1241 = vmatprep.subr.mxu0 0.0
        %1242 = vmatpush1.msra.mxu0 0.0
        %1243 = vmatprep.subr.mxu0 0.0
        %1244 = vmatpush1.msra.mxu0 0.0
        %1245 = vmatprep.subr.mxu0 0.0
        %1246 = vmatpush1.msra.mxu0 0.0
        %1247 = vmatprep.subr.mxu0 0.0
        %1248 = vmatpush1.msra.mxu0 0.0
        %1249 = vmatprep.subr.mxu0 0.0
        %1250 = vmatpush1.msra.mxu0 0.0
        %1251 = vmatprep.subr.mxu0 0.0
        %1252 = vmatpush1.msra.mxu0 0.0
        %1253 = vmatprep.subr.mxu0 0.0
        %1254 = vmatpush1.msra.mxu0 0.0
        %1255 = vmatprep.subr.mxu0 0.0
        %1256 = vmatpush1.msra.mxu0 0.0
        %1257 = vmatprep.subr.mxu0 0.0
        %1258 = vmatpush1.msra.mxu0 0.0
        %1259 = vmatprep.subr.mxu0 0.0
        %1260 = vmatpush1.msra.mxu0 0.0
        %1261 = vmatprep.subr.mxu0 0.0
        %1262 = vmatpush1.msra.mxu0 0.0
        %1263 = vmatprep.subr.mxu0 0.0
        %1264 = vmatpush1.msra.mxu0 0.0
        %1265 = vmatprep.subr.mxu0 0.0
        %1266 = vmatpush1.msra.mxu0 0.0
        %1267 = vmatprep.subr.mxu0 0.0
        %1268 = vmatpush1.msra.mxu0 0.0
        %1269 = vmatprep.subr.mxu0 0.0
        %1270 = vmatpush1.msra.mxu0 0.0
        %1271 = vmatprep.subr.mxu0 0.0
        %1272 = vmatpush1.msra.mxu0 0.0
        %1273 = vmatprep.subr.mxu0 0.0
        %1274 = vmatpush1.msra.mxu0 0.0
        %1275 = vmatprep.subr.mxu0 0.0
        %1276 = vmatpush1.msra.mxu0 0.0
        %1277 = vmatprep.subr.mxu0 0.0
        %1278 = vmatpush1.msra.mxu0 0.0
        %1279 = vmatprep.mubr.f32.mxu0 0.0
        %1280 = vmatmul.mubr.f32.gmra.mrb[0].mxu0 %v556
        %v1281 = vpop.f32.mrb[0].mxu0
        %v1282 = vadd.f32 %v1208, %v1281
        %v1283 = vpop.f32.mrb[0].mxu0
        %1284 = vmatprep.mubr.f32.mxu0 0.0
        %1285 = vmatmul.mubr.f32.gmra.mrb[0].mxu0 %v559
        %v1286 = vpop.f32.mrb[0].mxu0
        %v1287 = vadd.f32 %v1209, %v1286
        %v1288 = vpop.f32.mrb[0].mxu0
        %1289 = vmatprep.mubr.f32.mxu0 0.0
        %1290 = vmatmul.mubr.f32.gmra.mrb[0].mxu0 %v562
        %v1291 = vpop.f32.mrb[0].mxu0
        %v1292 = vadd.f32 %v1210, %v1291
        %v1293 = vpop.f32.mrb[0].mxu0
        %1294 = vmatprep.mubr.f32.mxu0 0.0
        %1295 = vmatmul.mubr.f32.gmra.mrb[0].mxu0 %v565
        %v1296 = vpop.f32.mrb[0].mxu0
        %v1297 = vadd.f32 %v1211, %v1296
        %v1298 = vpop.f32.mrb[0].mxu0
        %1299 = vdwg.mxu0
        %v1300 = vmul.f32 %v1282, %v511
        %v1301 = vmul.f32 %v1287, %v512
        %v1302 = vmul.f32 %v1292, %v513
        %v1303 = vmul.f32 %v1297, %v514
        %s1304 = scalar_lea.vmem %s404, 160 [#allocation8]
        %1305 = vst.msk [vmem:[%s1304] sm:$0xff] %vm659, %v1300
        %1306 = vst.msk [vmem:[%s1304 + $0x8] sm:$0xff] %vm659, %v1301
        %1307 = vst.msk [vmem:[%s1304 + $0x10] sm:$0xff] %vm659, %v1302
        %1308 = vst.msk [vmem:[%s1304 + $0x18] sm:$0xff] %vm659, %v1303
        %s1309 = sld [smem:[#allocation3 + $0x6]]
        %v1310 = vstv %s1309
        %v1311 = vmul.f32 %v511, %v1310
        %v1312 = vmul.f32 %v512, %v1310
        %v1313 = vmul.f32 %v513, %v1310
        %v1314 = vmul.f32 %v514, %v1310
        %s1315 = sld [smem:[#allocation3 + $0x86]]
        %v1316 = vstv %s1315
        %v1317 = vmul.f32 %v515, %v1316
        %v1318 = vmul.f32 %v516, %v1316
        %v1319 = vmul.f32 %v517, %v1316
        %v1320 = vmul.f32 %v518, %v1316
        %v1321 = vadd.f32 %v1311, %v1317
        %v1322 = vadd.f32 %v1312, %v1318
        %v1323 = vadd.f32 %v1313, %v1319
        %v1324 = vadd.f32 %v1314, %v1320
        %s1325 = sld [smem:[#allocation3 + $0x106]]
        %v1326 = vstv %s1325
        %v1327 = vmul.f32 %v519, %v1326
        %v1328 = vmul.f32 %v520, %v1326
        %v1329 = vmul.f32 %v521, %v1326
        %v1330 = vmul.f32 %v522, %v1326
        %v1331 = vadd.f32 %v1321, %v1327
        %v1332 = vadd.f32 %v1322, %v1328
        %v1333 = vadd.f32 %v1323, %v1329
        %v1334 = vadd.f32 %v1324, %v1330
        %s1335 = sld [smem:[#allocation6 + $0x6]]
        %v1336 = vstv %s1335
        %v1337 = vadd.f32 %v1331, %v1336
        %v1338 = vadd.f32 %v1332, %v1336
        %v1339 = vadd.f32 %v1333, %v1336
        %v1340 = vadd.f32 %v1334, %v1336
        %v1341 = vrot.slane %v508, 4
        %v1342 = vsel %vm432, %v1341, 0
        %1344 = vmatprep.subr.mxu0 0.0
        %1345 = vmatpush1.msra.mxu0 %v1342
        %1346 = vmatprep.subr.mxu0 0.0
        %1347 = vmatpush1.msra.mxu0 0.0
        %1348 = vmatprep.subr.mxu0 0.0
        %1349 = vmatpush1.msra.mxu0 0.0
        %1350 = vmatprep.subr.mxu0 0.0
        %1351 = vmatpush1.msra.mxu0 0.0
        %1352 = vmatprep.subr.mxu0 0.0
        %1353 = vmatpush1.msra.mxu0 0.0
        %1354 = vmatprep.subr.mxu0 0.0
        %1355 = vmatpush1.msra.mxu0 0.0
        %1356 = vmatprep.subr.mxu0 0.0
        %1357 = vmatpush1.msra.mxu0 0.0
        %1358 = vmatprep.subr.mxu0 0.0
        %1359 = vmatpush1.msra.mxu0 0.0
        %1360 = vmatprep.subr.mxu0 0.0
        %1361 = vmatpush1.msra.mxu0 0.0
        %1362 = vmatprep.subr.mxu0 0.0
        %1363 = vmatpush1.msra.mxu0 0.0
        %1364 = vmatprep.subr.mxu0 0.0
        %1365 = vmatpush1.msra.mxu0 0.0
        %1366 = vmatprep.subr.mxu0 0.0
        %1367 = vmatpush1.msra.mxu0 0.0
        %1368 = vmatprep.subr.mxu0 0.0
        %1369 = vmatpush1.msra.mxu0 0.0
        %1370 = vmatprep.subr.mxu0 0.0
        %1371 = vmatpush1.msra.mxu0 0.0
        %1372 = vmatprep.subr.mxu0 0.0
        %1373 = vmatpush1.msra.mxu0 0.0
        %1374 = vmatprep.subr.mxu0 0.0
        %1375 = vmatpush1.msra.mxu0 0.0
        %1376 = vmatprep.subr.mxu0 0.0
        %1377 = vmatpush1.msra.mxu0 0.0
        %1378 = vmatprep.subr.mxu0 0.0
        %1379 = vmatpush1.msra.mxu0 0.0
        %1380 = vmatprep.subr.mxu0 0.0
        %1381 = vmatpush1.msra.mxu0 0.0
        %1382 = vmatprep.subr.mxu0 0.0
        %1383 = vmatpush1.msra.mxu0 0.0
        %1384 = vmatprep.subr.mxu0 0.0
        %1385 = vmatpush1.msra.mxu0 0.0
        %1386 = vmatprep.subr.mxu0 0.0
        %1387 = vmatpush1.msra.mxu0 0.0
        %1388 = vmatprep.subr.mxu0 0.0
        %1389 = vmatpush1.msra.mxu0 0.0
        %1390 = vmatprep.subr.mxu0 0.0
        %1391 = vmatpush1.msra.mxu0 0.0
        %1392 = vmatprep.subr.mxu0 0.0
        %1393 = vmatpush1.msra.mxu0 0.0
        %1394 = vmatprep.subr.mxu0 0.0
        %1395 = vmatpush1.msra.mxu0 0.0
        %1396 = vmatprep.subr.mxu0 0.0
        %1397 = vmatpush1.msra.mxu0 0.0
        %1398 = vmatprep.subr.mxu0 0.0
        %1399 = vmatpush1.msra.mxu0 0.0
        %1400 = vmatprep.subr.mxu0 0.0
        %1401 = vmatpush1.msra.mxu0 0.0
        %1402 = vmatprep.subr.mxu0 0.0
        %1403 = vmatpush1.msra.mxu0 0.0
        %1404 = vmatprep.subr.mxu0 0.0
        %1405 = vmatpush1.msra.mxu0 0.0
        %1406 = vmatprep.subr.mxu0 0.0
        %1407 = vmatpush1.msra.mxu0 0.0
        %1408 = vmatprep.mubr.f32.mxu0 0.0
        %1409 = vmatmul.mubr.f32.gmra.mrb[0].mxu0 %v556
        %v1410 = vpop.f32.mrb[0].mxu0
        %v1411 = vadd.f32 %v1337, %v1410
        %v1412 = vpop.f32.mrb[0].mxu0
        %1413 = vmatprep.mubr.f32.mxu0 0.0
        %1414 = vmatmul.mubr.f32.gmra.mrb[0].mxu0 %v559
        %v1415 = vpop.f32.mrb[0].mxu0
        %v1416 = vadd.f32 %v1338, %v1415
        %v1417 = vpop.f32.mrb[0].mxu0
        %1418 = vmatprep.mubr.f32.mxu0 0.0
        %1419 = vmatmul.mubr.f32.gmra.mrb[0].mxu0 %v562
        %v1420 = vpop.f32.mrb[0].mxu0
        %v1421 = vadd.f32 %v1339, %v1420
        %v1422 = vpop.f32.mrb[0].mxu0
        %1423 = vmatprep.mubr.f32.mxu0 0.0
        %1424 = vmatmul.mubr.f32.gmra.mrb[0].mxu0 %v565
        %v1425 = vpop.f32.mrb[0].mxu0
        %v1426 = vadd.f32 %v1340, %v1425
        %v1427 = vpop.f32.mrb[0].mxu0
        %1428 = vdwg.mxu0
        %v1429 = vmul.f32 %v1411, %v511
        %v1430 = vmul.f32 %v1416, %v512
        %v1431 = vmul.f32 %v1421, %v513
        %v1432 = vmul.f32 %v1426, %v514
        %s1433 = scalar_lea.vmem %s404, 192 [#allocation8]
        %1434 = vst.msk [vmem:[%s1433] sm:$0xff] %vm659, %v1429
        %1435 = vst.msk [vmem:[%s1433 + $0x8] sm:$0xff] %vm659, %v1430
        %1436 = vst.msk [vmem:[%s1433 + $0x10] sm:$0xff] %vm659, %v1431
        %1437 = vst.msk [vmem:[%s1433 + $0x18] sm:$0xff] %vm659, %v1432
        %s1438 = sld [smem:[#allocation3 + $0x7]]
        %v1439 = vstv %s1438
        %v1440 = vmul.f32 %v511, %v1439
        %v1441 = vmul.f32 %v512, %v1439
        %v1442 = vmul.f32 %v513, %v1439
        %v1443 = vmul.f32 %v514, %v1439
        %s1444 = sld [smem:[#allocation3 + $0x87]]
        %v1445 = vstv %s1444
        %v1446 = vmul.f32 %v515, %v1445
        %v1447 = vmul.f32 %v516, %v1445
        %v1448 = vmul.f32 %v517, %v1445
        %v1449 = vmul.f32 %v518, %v1445
        %v1450 = vadd.f32 %v1440, %v1446
        %v1451 = vadd.f32 %v1441, %v1447
        %v1452 = vadd.f32 %v1442, %v1448
        %v1453 = vadd.f32 %v1443, %v1449
        %s1454 = sld [smem:[#allocation3 + $0x107]]
        %v1455 = vstv %s1454
        %v1456 = vmul.f32 %v519, %v1455
        %v1457 = vmul.f32 %v520, %v1455
        %v1458 = vmul.f32 %v521, %v1455
        %v1459 = vmul.f32 %v522, %v1455
        %v1460 = vadd.f32 %v1450, %v1456
        %v1461 = vadd.f32 %v1451, %v1457
        %v1462 = vadd.f32 %v1452, %v1458
        %v1463 = vadd.f32 %v1453, %v1459
        %s1464 = sld [smem:[#allocation6 + $0x7]]
        %v1465 = vstv %s1464
        %v1466 = vadd.f32 %v1460, %v1465
        %v1467 = vadd.f32 %v1461, %v1465
        %v1468 = vadd.f32 %v1462, %v1465
        %v1469 = vadd.f32 %v1463, %v1465
        %v1470 = vrot.slane %v508, 6
        %v1471 = vsel %vm432, %v1470, 0
        %1473 = vmatprep.subr.mxu0 0.0
        %1474 = vmatpush1.msra.mxu0 %v1471
        %1475 = vmatprep.subr.mxu0 0.0
        %1476 = vmatpush1.msra.mxu0 0.0
        %1477 = vmatprep.subr.mxu0 0.0
        %1478 = vmatpush1.msra.mxu0 0.0
        %1479 = vmatprep.subr.mxu0 0.0
        %1480 = vmatpush1.msra.mxu0 0.0
        %1481 = vmatprep.subr.mxu0 0.0
        %1482 = vmatpush1.msra.mxu0 0.0
        %1483 = vmatprep.subr.mxu0 0.0
        %1484 = vmatpush1.msra.mxu0 0.0
        %1485 = vmatprep.subr.mxu0 0.0
        %1486 = vmatpush1.msra.mxu0 0.0
        %1487 = vmatprep.subr.mxu0 0.0
        %1488 = vmatpush1.msra.mxu0 0.0
        %1489 = vmatprep.subr.mxu0 0.0
        %1490 = vmatpush1.msra.mxu0 0.0
        %1491 = vmatprep.subr.mxu0 0.0
        %1492 = vmatpush1.msra.mxu0 0.0
        %1493 = vmatprep.subr.mxu0 0.0
        %1494 = vmatpush1.msra.mxu0 0.0
        %1495 = vmatprep.subr.mxu0 0.0
        %1496 = vmatpush1.msra.mxu0 0.0
        %1497 = vmatprep.subr.mxu0 0.0
        %1498 = vmatpush1.msra.mxu0 0.0
        %1499 = vmatprep.subr.mxu0 0.0
        %1500 = vmatpush1.msra.mxu0 0.0
        %1501 = vmatprep.subr.mxu0 0.0
        %1502 = vmatpush1.msra.mxu0 0.0
        %1503 = vmatprep.subr.mxu0 0.0
        %1504 = vmatpush1.msra.mxu0 0.0
        %1505 = vmatprep.subr.mxu0 0.0
        %1506 = vmatpush1.msra.mxu0 0.0
        %1507 = vmatprep.subr.mxu0 0.0
        %1508 = vmatpush1.msra.mxu0 0.0
        %1509 = vmatprep.subr.mxu0 0.0
        %1510 = vmatpush1.msra.mxu0 0.0
        %1511 = vmatprep.subr.mxu0 0.0
        %1512 = vmatpush1.msra.mxu0 0.0
        %1513 = vmatprep.subr.mxu0 0.0
        %1514 = vmatpush1.msra.mxu0 0.0
        %1515 = vmatprep.subr.mxu0 0.0
        %1516 = vmatpush1.msra.mxu0 0.0
        %1517 = vmatprep.subr.mxu0 0.0
        %1518 = vmatpush1.msra.mxu0 0.0
        %1519 = vmatprep.subr.mxu0 0.0
        %1520 = vmatpush1.msra.mxu0 0.0
        %1521 = vmatprep.subr.mxu0 0.0
        %1522 = vmatpush1.msra.mxu0 0.0
        %1523 = vmatprep.subr.mxu0 0.0
        %1524 = vmatpush1.msra.mxu0 0.0
        %1525 = vmatprep.subr.mxu0 0.0
        %1526 = vmatpush1.msra.mxu0 0.0
        %1527 = vmatprep.subr.mxu0 0.0
        %1528 = vmatpush1.msra.mxu0 0.0
        %1529 = vmatprep.subr.mxu0 0.0
        %1530 = vmatpush1.msra.mxu0 0.0
        %1531 = vmatprep.subr.mxu0 0.0
        %1532 = vmatpush1.msra.mxu0 0.0
        %1533 = vmatprep.subr.mxu0 0.0
        %1534 = vmatpush1.msra.mxu0 0.0
        %1535 = vmatprep.subr.mxu0 0.0
        %1536 = vmatpush1.msra.mxu0 0.0
        %1537 = vmatprep.mubr.f32.mxu0 0.0
        %1538 = vmatmul.mubr.f32.gmra.mrb[0].mxu0 %v556
        %v1539 = vpop.f32.mrb[0].mxu0
        %v1540 = vadd.f32 %v1466, %v1539
        %v1541 = vpop.f32.mrb[0].mxu0
        %1542 = vmatprep.mubr.f32.mxu0 0.0
        %1543 = vmatmul.mubr.f32.gmra.mrb[0].mxu0 %v559
        %v1544 = vpop.f32.mrb[0].mxu0
        %v1545 = vadd.f32 %v1467, %v1544
        %v1546 = vpop.f32.mrb[0].mxu0
        %1547 = vmatprep.mubr.f32.mxu0 0.0
        %1548 = vmatmul.mubr.f32.gmra.mrb[0].mxu0 %v562
        %v1549 = vpop.f32.mrb[0].mxu0
        %v1550 = vadd.f32 %v1468, %v1549
        %v1551 = vpop.f32.mrb[0].mxu0
        %1552 = vmatprep.mubr.f32.mxu0 0.0
        %1553 = vmatmul.mubr.f32.gmra.mrb[0].mxu0 %v565
        %v1554 = vpop.f32.mrb[0].mxu0
        %v1555 = vadd.f32 %v1469, %v1554
        %v1556 = vpop.f32.mrb[0].mxu0
        %1557 = vdwg.mxu0
        %v1558 = vmul.f32 %v1540, %v511
        %v1559 = vmul.f32 %v1545, %v512
        %v1560 = vmul.f32 %v1550, %v513
        %v1561 = vmul.f32 %v1555, %v514
        %s1562 = scalar_lea.vmem %s404, 224 [#allocation8]
        %1563 = vst.msk [vmem:[%s1562] sm:$0xff] %vm659, %v1558
        %1564 = vst.msk [vmem:[%s1562 + $0x8] sm:$0xff] %vm659, %v1559
        %1565 = vst.msk [vmem:[%s1562 + $0x10] sm:$0xff] %vm659, %v1560
        %1566 = vst.msk [vmem:[%s1562 + $0x18] sm:$0xff] %vm659, %v1561
        %s1567 = sand.u32 %s187, 1
        %s1568 = scalar_lea.sflag [#allocation4], %s1567
        %s1569 = sand.u32 %s187, 1
        %s1570 = smul.addr %s1569, 256
        %s1571 = scalar_lea.vmem [#allocation8], %s1570
        // Predicated region
        $region91: #{_net_forward.3} parent=77 // pred_check
          %p1572 = pneg %p197
        $region92: #{_net_forward.3} parent=77 // pred_check_branch
          %1574 = sbr.rel (%p1572) target = $region94
        $region93: #{_net_forward.3} parent=77 // pred_region
          #allocation10 [shape = 'u32[6]{0}', space=smem, size = 0x18, scoped, tag = 'DMA stride descriptor']
          %s1575 = smul.u32 4, %s27
          %s1577 = ssub.s32 4096, 4096
          %1578 = vsyncadd %s1568, %s1577
          %s1579 = smul.addr %s26, 64
          %s1580 = sadd.s32 %s1575, %s1579
          %s1581 = smul.addr %s1580, 128
          %s1582 = scalar_lea.hbm %s6, %s1581
          %s1584 = sshll.u32 1, 14
          %s1585 = sxor.u32 4294967295, %s1584
          %s1588 = sshll.u32 7, 18
          %s1589 = sxor.u32 4294967295, %s1588
          %s1590 = sand.u32 0, %s1589
          %s1592 = sor.u32 %s1590, 0
          %s1594 = sshll.u32 3, 24
          %s1595 = sxor.u32 4294967295, %s1594
          %s1596 = sand.u32 %s1592, %s1595
          %s1598 = sor.u32 %s1596, 0
          %s1599 = sshll.u32 %s1571, 4
          %s1600 = int_to_ptr.vmem [resolvable:$true] %s1599
          %1606 = sst [smem:[#allocation10]] 512
          %s1607 = scalar_lea.smem [#allocation10], 1
          %1608 = sst [smem:[%s1607]] 1024
          %s1609 = scalar_lea.smem [#allocation10], 2
          %1610 = sst [smem:[%s1609]] 4
          %s1611 = scalar_lea.smem [#allocation10], 3
          %1612 = sst [smem:[%s1611]] 128
          %s1613 = scalar_lea.smem [#allocation10], 4
          %1614 = sst [smem:[%s1613]] 128
          %s1615 = scalar_lea.smem [#allocation10], 5
          %1616 = sst [smem:[%s1615]] 8
          %1618 = dma.general %s1600, 4096, %s1582, %s1568, [#allocation9], [#allocation10], %s1598, 0
        $region94: #{_net_forward.3} parent=77 // pred_fallthru
          _
      $region78: #{_net_forward.3} parent=5 // pred_fallthru
        _
      %p1619 = scmp.le.s32.totalorder 2, %s17
      // Predicated region
      $region95: #{_net_forward.3} parent=5 // pred_check
        %p1620 = pneg %p1619
      $region96: #{_net_forward.3} parent=5 // pred_check_branch
        %1622 = sbr.rel (%p1620) target = $region98
      $region97: #{_net_forward.3} parent=5 // pred_region
        %s1623 = ssub.s32 %s17, 2
        // Predicated region
        $region99: #{_net_forward.3} parent=97 // pred_check
          %p1624 = pneg %p203
        $region100: #{_net_forward.3} parent=97 // pred_check_branch
          %1626 = sbr.rel (%p1624) target = $region102
        $region101: #{_net_forward.3} parent=97 // pred_region
          %s1627 = sand.u32 %s188, 1
          %s1628 = scalar_lea.sflag [#allocation4], %s1627
          %s1629 = sand.u32 %s188, 1
          %s1630 = smul.addr %s1629, 256
          %s1631 = scalar_lea.vmem [#allocation8], %s1630
          %1632 = dma.done %s1628, 4096
        $region102: #{_net_forward.3} parent=97 // pred_fallthru
          _
      $region98: #{_net_forward.3} parent=5 // pred_fallthru
        _
    $region6: #{_net_forward.3} parent=1 // loop_footer
      %s21 = sadd.s32 1, %s17
    $region7: #{_net_forward.3} parent=1 // loop_footer_branch
      %16 = sbr.rel target = $region3
    $region8: #{_net_forward.3} parent=1 // loop_exit
      _
    %1633 = vsyncpa [#allocation4], 1
    %s1634 = scalar_lea.sflag [#allocation4], 1
    %1635 = vsyncpa %s1634, 1
    %1636 = vsyncpa [#allocation5], 1
    %s1637 = scalar_lea.sflag [#allocation5], 1
    %1638 = vsyncpa %s1637, 1
    %1639 = vsyncpa [#allocation7], 1

</llo_original>
